<compile_context>
chip_gen: v5e
topology: v5e:2x2
jax: 0.10.0
libtpu: 0.0.40
codegen_flags: <defaults>
</compile_context>

<pallas_src>
import functools

import jax
import jax.numpy as jnp
import numpy as np
from jax.experimental import pallas as pl
from jax.experimental.pallas import tpu as pltpu

BN_EPS = 1e-5
# Scoped-VMEM limit applied to both kernels; raise to ~100 MiB on v5e/v6e,
# keep <= ~48 MiB on v7x (64 MiB physical) for production shapes.
VMEM_LIMIT_BYTES = 64 * 1024 * 1024


def _round_up(x, m):
    return (x + m - 1) // m * m


# ---------------------------------------------------------------------------
# Kernel 1: Tucker core contraction (per-query part, == get_queries)
# ---------------------------------------------------------------------------
def _tucker_core_kernel(lhs_ref, relt_ref, w_ref, s0_ref, t0_ref, s1_ref, t1_ref,
                        core_ref):
    """core = BN1( sum_i (rel_t[:, i:i+1] * BN0(lhs)) @ W[i] )   (no P scratch)."""
    h = lhs_ref[...] * s0_ref[...] + t0_ref[...]          # folded eval-mode BN0, [tb, d] f32
    relt = relt_ref[...]                                  # [tb, d] f32
    d = h.shape[1]
    cdt = w_ref.dtype                                     # bf16 MXU operands, f32 accumulation

    # Per-i accumulation form of  core[b,k] = sum_{i,j} rel_t[b,i] h[b,j] W[i,j,k].
    # Avoids materialising the [tb, d*d] Kronecker rows and the masked, misaligned
    # lane-slice stores of a P build; W[i] loads are aligned along the leading axis.
    # TODO(synk): for very large d, chunk this static loop (e.g. lax.fori_loop over
    # groups of i) to bound unrolled code size.
    def partial_i(i):
        ph = (relt[:, i:i + 1] * h).astype(cdt)           # [tb, d]
        return jnp.dot(ph, w_ref[i], preferred_element_type=jnp.float32)

    acc = partial_i(0)
    for i in range(1, d):
        acc = acc + partial_i(i)

    core = acc * s1_ref[...] + t1_ref[...]                # folded eval-mode BN1 (f32)
    core_ref[...] = core.astype(core_ref.dtype)


# ---------------------------------------------------------------------------
# Kernel 2: entity scoring, streamed over prepared E^T tiles (lane-dense)
# ---------------------------------------------------------------------------
def _entity_scores_kernel(core_ref, et_ref, pred_ref):
    """pred_tile = core @ E^T_tile  (bf16 operands, f32 accumulation)."""
    c = core_ref[...].astype(et_ref.dtype)                # tiny [B, d] cast per tile
    pred_ref[...] = jnp.dot(c, et_ref[...],
                            preferred_element_type=jnp.float32).astype(pred_ref.dtype)


# ---------------------------------------------------------------------------
# One-time parameter preparation (hoisted out of the per-call hot path)
# ---------------------------------------------------------------------------
def prepare_tuckertnt_params(raw_params, *, tile_n=2048, compute_dtype=jnp.bfloat16):
    """Fold eval-mode BN, cast W, and build a bf16, tile-padded E^T -- once."""
    E, W = raw_params['E'], raw_params['W']
    g0, b0, m0, v0 = raw_params['bn0']
    g1, b1, m1, v1 = raw_params['bn1']
    Ne, d = E.shape

    s0 = (g0 * jax.lax.rsqrt(v0 + BN_EPS)).astype(jnp.float32)
    t0 = (b0 - m0 * s0).astype(jnp.float32)
    s1 = (g1 * jax.lax.rsqrt(v1 + BN_EPS)).astype(jnp.float32)
    t1 = (b1 - m1 * s1).astype(jnp.float32)

    tile = min(_round_up(tile_n, 128), _round_up(Ne, 128))
    ne_pad = _round_up(Ne, tile)
    et = E.T.astype(compute_dtype)                        # [d, Ne] bf16, one-time transpose
    if ne_pad != Ne:
        et = jnp.pad(et, ((0, 0), (0, ne_pad - Ne)))      # padded once at prep time

    prep = {
        'w_c': W.astype(compute_dtype),                   # [d, d, d] bf16 core tensor
        'et': et,                                         # [d, ne_pad] bf16
        's0': s0, 't0': t0, 's1': s1, 't1': t1,
        'tile': int(tile),
        'num_entities': int(Ne),
    }
    out = dict(raw_params)
    out['prep'] = prep
    return out


# ---------------------------------------------------------------------------
# Forward wrapper
# ---------------------------------------------------------------------------
def tuckertnt_pred(lhs, rel_t, prep, *, tile_b=128, out_dtype=jnp.float32,
                   return_padded=False):
    """pred [B, num_entities] = BN1( bmm(BN0(lhs), rel_t @ W) ) @ E^T."""
    B, d = lhs.shape
    et = prep['et']
    tile = prep['tile']
    Ne = prep['num_entities']
    ne_pad = et.shape[1]

    # --- Kernel 1: Tucker core, tiled over the batch axis -----------------------
    tile_b = min(tile_b, _round_up(B, 8))                 # sublane-aligned batch tile
    b_pad = _round_up(B, tile_b)
    lhs_p = lhs.astype(jnp.float32)
    relt_p = rel_t.astype(jnp.float32)
    if b_pad != B:
        lhs_p = jnp.pad(lhs_p, ((0, b_pad - B), (0, 0)))
        relt_p = jnp.pad(relt_p, ((0, b_pad - B), (0, 0)))

    const_vec = pl.BlockSpec((1, d), lambda b: (0, 0))    # batch-invariant BN affines
    core = pl.pallas_call(
        _tucker_core_kernel,
        out_shape=jax.ShapeDtypeStruct((b_pad, d), jnp.float32),
        grid=(b_pad // tile_b,),
        in_specs=[pl.BlockSpec((tile_b, d), lambda b: (b, 0)),       # lhs tile
                  pl.BlockSpec((tile_b, d), lambda b: (b, 0)),       # rel_t tile
                  pl.BlockSpec((d, d, d), lambda b: (0, 0, 0)),      # W (batch-invariant)
                  const_vec, const_vec, const_vec, const_vec],
        out_specs=pl.BlockSpec((tile_b, d), lambda b: (b, 0)),
        compiler_params=pltpu.CompilerParams(
            dimension_semantics=("parallel",),
            vmem_limit_bytes=VMEM_LIMIT_BYTES),
    )(lhs_p, relt_p, prep['w_c'], prep['s0'], prep['t0'], prep['s1'], prep['t1'])
    if b_pad != B:
        core = core[:B]                                   # tiny [B, d] trim

    # --- Kernel 2: entity scoring over wide, lane-dense E^T tiles ---------------
    flops = 2 * B * d * ne_pad
    bytes_accessed = int(d * ne_pad * 2                                   # E^T (bf16)
                         + B * ne_pad * np.dtype(out_dtype).itemsize      # pred writeback
                         + B * d * 4)                                     # core
    pred = pl.pallas_call(
        _entity_scores_kernel,
        out_shape=jax.ShapeDtypeStruct((B, ne_pad), out_dtype),
        grid=(ne_pad // tile,),
        in_specs=[pl.BlockSpec((B, d), lambda n: (0, 0)),      # core resident in VMEM
                  pl.BlockSpec((d, tile), lambda n: (0, n))],  # E^T tile stream
        out_specs=pl.BlockSpec((B, tile), lambda n: (0, n)),
        compiler_params=pltpu.CompilerParams(
            dimension_semantics=("parallel",),
            vmem_limit_bytes=VMEM_LIMIT_BYTES),
        cost_estimate=pl.CostEstimate(flops=flops, transcendentals=0,
                                      bytes_accessed=bytes_accessed),
    )(core, et)

    if return_padded:
        return pred           # padded columns are exact zeros; mask before ranking/softmax
    return pred[:, :Ne]


def p4_norm(t):
    return jnp.sum(jnp.abs(t) ** 4) ** 0.25


def tuckertnt_forward(x, params, *, tile_b=128, out_dtype=jnp.float32):
    """Full TuckERTNT.forward: (pred, regularizer, T.weight).

    Embedding gathers, rel_t composition and the small scalar p=4 regularizer
    norms are plain-JAX glue; the matmul hot path (Tucker contraction + entity
    scoring) runs in the two Pallas kernels.
    """
    E, R, T, R_noT, W = (params['E'], params['R'], params['T'],
                         params['R_noT'], params['W'])
    prep = params['prep']

    lhs = E[x[:, 0]]
    rel = R[x[:, 1]]
    rel_no_time = R_noT[x[:, 1]]
    rhs = E[x[:, 2]]
    time = T[x[:, 3]]
    rel_t = rel * time + rel_no_time

    pred = tuckertnt_pred(lhs, rel_t, prep, tile_b=tile_b, out_dtype=out_dtype)

    # regularizer uses bn0(lhs) (lhs was reassigned in the PyTorch code before the norm)
    lhs_bn = lhs * prep['s0'] + prep['t0']
    regularizer = (p4_norm(lhs_bn), p4_norm(rel * time), p4_norm(rel_no_time),
                   p4_norm(rhs), p4_norm(W))
    return pred, regularizer, T


def ref_pred(lhs, rel_t, E, W, bn0, bn1, compute_dtype=jnp.bfloat16):
    """Pure-JAX reference of the PyTorch eval-mode forward with the same operand
    quantization as the kernels (set compute_dtype=jnp.float32 for exact f32 math)."""
    g0, b0, m0, v0 = bn0
    g1, b1, m1, v1 = bn1
    B, d = lhs.shape
    h = (lhs - m0) * jax.lax.rsqrt(v0 + BN_EPS) * g0 + b0
    P = (rel_t[:, :, None] * h[:, None, :]).reshape(B, d * d).astype(compute_dtype)
    core = jnp.dot(P, W.reshape(d * d, d).astype(compute_dtype),
                   preferred_element_type=jnp.float32)
    core = (core - m1) * jax.lax.rsqrt(v1 + BN_EPS) * g1 + b1
    return jnp.dot(core.astype(compute_dtype), E.T.astype(compute_dtype),
                   preferred_element_type=jnp.float32)


def make_params(key, n_ent, n_rel, n_ts, dim):
    ks = jax.random.split(key, 5)

    def emb(k, n):
        w = jax.random.normal(k, (n, dim), jnp.float32)
        return w.at[0].set(0.0)                      # padding_idx=0

    params = {
        'E': emb(ks[0], n_ent),
        'R': emb(ks[1], n_rel),
        'T': emb(ks[2], n_ts),
        'R_noT': emb(ks[3], n_rel),
        'W': jax.random.uniform(ks[4], (dim, dim, dim), jnp.float32, -1.0, 1.0),
        # BatchNorm1d fresh-module defaults (gamma, beta, running_mean, running_var)
        'bn0': (jnp.ones((1, dim), jnp.float32), jnp.zeros((1, dim), jnp.float32),
                jnp.zeros((1, dim), jnp.float32), jnp.ones((1, dim), jnp.float32)),
        'bn1': (jnp.ones((1, dim), jnp.float32), jnp.zeros((1, dim), jnp.float32),
                jnp.zeros((1, dim), jnp.float32), jnp.ones((1, dim), jnp.float32)),
    }
    return params


if __name__ == "__main__":
    B, dim = 16, 32
    n_ent, n_rel, n_ts = 300, 16, 16     # entity count deliberately not a multiple of 128

    key = jax.random.PRNGKey(0)
    kp, kx = jax.random.split(key)
    raw_params = make_params(kp, n_ent, n_rel, n_ts, dim)
    # One-time prep (BN folds, bf16 W, padded bf16 E^T).  tile_n=128 exercises a
    # multi-tile "parallel" entity grid + padding at toy sizes (default is 2048).
    params = prepare_tuckertnt_params(raw_params, tile_n=128)

    # quadruples (head, relation, tail, timestamp)
    x = jnp.stack([
        jax.random.randint(jax.random.fold_in(kx, 0), (B,), 0, n_ent),
        jax.random.randint(jax.random.fold_in(kx, 1), (B,), 0, n_rel),
        jax.random.randint(jax.random.fold_in(kx, 2), (B,), 0, n_ent),
        jax.random.randint(jax.random.fold_in(kx, 3), (B,), 0, n_ts),
    ], axis=1).astype(jnp.int32)

    # tile_b=8 exercises a multi-step batch grid for kernel 1 at toy sizes
    fwd = jax.jit(functools.partial(tuckertnt_forward, params=params, tile_b=8))
    pred, reg, T_weight = fwd(x)
    jax.block_until_ready(pred)
    jax.block_until_ready(reg)

    # correctness check against a pure-JAX reference with matching bf16-operand /
    # f32-accumulation matmuls
    E, R, T, R_noT, W = (raw_params['E'], raw_params['R'], raw_params['T'],
                         raw_params['R_noT'], raw_params['W'])
    lhs = E[x[:, 0]]
    rel_t = R[x[:, 1]] * T[x[:, 3]] + R_noT[x[:, 1]]
    expected = ref_pred(lhs, rel_t, E, W, raw_params['bn0'], raw_params['bn1'])
    np.testing.assert_allclose(np.asarray(pred), np.asarray(expected),
                               rtol=2e-2, atol=5e-1)

    assert pred.shape == (B, n_ent)
    assert T_weight.shape == (n_ts, dim)
    assert len(reg) == 5

    print("KERNEL_OK")
</pallas_src>

<mosaic_0001>
module attributes {stable_mosaic.version = 11 : i64} {
  func.func @_entity_scores_kernel(%arg0: i32, %arg1: memref<16x32xf32, #tpu.memory_space<vmem>>, %arg2: memref<32x128xbf16, #tpu.memory_space<vmem>>, %arg3: memref<16x128xf32, #tpu.memory_space<vmem>>) attributes {dimension_semantics = [#tpu.dimension_semantics<parallel>], iteration_bounds = array<i64: 3>, scalar_prefetch = 0 : i64, scratch_operands = 0 : i64, tpu.core_type = #tpu.core_type<tc>, window_params = [{pipeline_mode = #tpu.pipeline_mode<synchronous>, transform_indices = @transform_0, window_bounds = array<i64: 16, 32>}, {transform_indices = @transform_1, window_bounds = array<i64: 32, 128>}, {transform_indices = @transform_2, window_bounds = array<i64: 16, 128>}]} {
    %c0 = arith.constant 0 : index
    %c0_0 = arith.constant 0 : index
    %0 = vector.load %arg1[%c0, %c0_0] : memref<16x32xf32, #tpu.memory_space<vmem>>, vector<16x32xf32>
    %1 = arith.truncf %0 : vector<16x32xf32> to vector<16x32xbf16>
    %c0_1 = arith.constant 0 : index
    %c0_2 = arith.constant 0 : index
    %2 = vector.load %arg2[%c0_1, %c0_2] : memref<32x128xbf16, #tpu.memory_space<vmem>>, vector<32x128xbf16>
    %cst = arith.constant dense<0.000000e+00> : vector<16x128xf32>
    %3 = tpu.matmul %1, %2, %cst {dimension_numbers = #tpu.dot_dimension_numbers<[1], [0], [0], [1], [0, 0, 1, 1], [], []>} : vector<16x32xbf16>, vector<32x128xbf16>, vector<16x128xf32> -> vector<16x128xf32>
    %c0_3 = arith.constant 0 : index
    %c0_4 = arith.constant 0 : index
    %4 = vector.load %arg3[%c0_3, %c0_4] : memref<16x128xf32, #tpu.memory_space<vmem>>, vector<16x128xf32>
    tpu.vector_store %arg3[%c0_3, %c0_4], %3 {strides = array<i32>} : memref<16x128xf32, #tpu.memory_space<vmem>>, vector<16x128xf32>,
    return
  }
  func.func @transform_0(%arg0: i32) -> (i32, i32) {
    %c0_i32 = arith.constant 0 : i32
    %c0_i32_0 = arith.constant 0 : i32
    %c0_i32_1 = arith.constant 0 : i32
    return %c0_i32, %c0_i32_0 : i32, i32
  }
  func.func @transform_1(%arg0: i32) -> (i32, i32) {
    %c0_i32 = arith.constant 0 : i32
    %c0_i32_0 = arith.constant 0 : i32
    return %c0_i32, %arg0 : i32, i32
  }
  func.func @transform_2(%arg0: i32) -> (i32, i32) {
    %c0_i32 = arith.constant 0 : i32
    %c0_i32_0 = arith.constant 0 : i32
    return %c0_i32, %arg0 : i32, i32
  }
}

module attributes {stable_mosaic.version = 11 : i64} {
  func.func @_tucker_core_kernel(%arg0: i32, %arg1: memref<8x32xf32, #tpu.memory_space<vmem>>, %arg2: memref<8x32xf32, #tpu.memory_space<vmem>>, %arg3: memref<32x32x32xbf16, #tpu.memory_space<vmem>>, %arg4: memref<1x32xf32, #tpu.memory_space<vmem>>, %arg5: memref<1x32xf32, #tpu.memory_space<vmem>>, %arg6: memref<1x32xf32, #tpu.memory_space<vmem>>, %arg7: memref<1x32xf32, #tpu.memory_space<vmem>>, %arg8: memref<8x32xf32, #tpu.memory_space<vmem>>) attributes {dimension_semantics = [#tpu.dimension_semantics<parallel>], iteration_bounds = array<i64: 2>, scalar_prefetch = 0 : i64, scratch_operands = 0 : i64, tpu.core_type = #tpu.core_type<tc>, window_params = [{transform_indices = @transform_0, window_bounds = array<i64: 8, 32>}, {transform_indices = @transform_1, window_bounds = array<i64: 8, 32>}, {pipeline_mode = #tpu.pipeline_mode<synchronous>, transform_indices = @transform_2, window_bounds = array<i64: 32, 32, 32>}, {pipeline_mode = #tpu.pipeline_mode<synchronous>, transform_indices = @transform_3, window_bounds = array<i64: 1, 32>}, {pipeline_mode = #tpu.pipeline_mode<synchronous>, transform_indices = @transform_4, window_bounds = array<i64: 1, 32>}, {pipeline_mode = #tpu.pipeline_mode<synchronous>, transform_indices = @transform_5, window_bounds = array<i64: 1, 32>}, {pipeline_mode = #tpu.pipeline_mode<synchronous>, transform_indices = @transform_6, window_bounds = array<i64: 1, 32>}, {transform_indices = @transform_7, window_bounds = array<i64: 8, 32>}]} {
    %c0 = arith.constant 0 : index
    %c0_0 = arith.constant 0 : index
    %0 = vector.load %arg1[%c0, %c0_0] : memref<8x32xf32, #tpu.memory_space<vmem>>, vector<8x32xf32>
    %c0_1 = arith.constant 0 : index
    %c0_2 = arith.constant 0 : index
    %1 = vector.load %arg4[%c0_1, %c0_2] : memref<1x32xf32, #tpu.memory_space<vmem>>, vector<1x32xf32>
    %2 = vector.broadcast %1 : vector<1x32xf32> to vector<8x32xf32>
    %3 = arith.mulf %0, %2 : vector<8x32xf32>
    %c0_3 = arith.constant 0 : index
    %c0_4 = arith.constant 0 : index
    %4 = vector.load %arg5[%c0_3, %c0_4] : memref<1x32xf32, #tpu.memory_space<vmem>>, vector<1x32xf32>
    %5 = vector.broadcast %4 : vector<1x32xf32> to vector<8x32xf32>
    %6 = arith.addf %3, %5 : vector<8x32xf32>
    %c0_5 = arith.constant 0 : index
    %c0_6 = arith.constant 0 : index
    %7 = vector.load %arg2[%c0_5, %c0_6] : memref<8x32xf32, #tpu.memory_space<vmem>>, vector<8x32xf32>
    %8 = vector.extract_strided_slice %7 {offsets = [0, 0], sizes = [8, 1], strides = [1, 1]} : vector<8x32xf32> to vector<8x1xf32>
    %9 = vector.broadcast %8 : vector<8x1xf32> to vector<8x32xf32>
    %10 = arith.mulf %9, %6 : vector<8x32xf32>
    %11 = arith.truncf %10 : vector<8x32xf32> to vector<8x32xbf16>
    %c0_7 = arith.constant 0 : index
    %c0_8 = arith.constant 0 : index
    %c0_9 = arith.constant 0 : index
    %12 = vector.load %arg3[%c0_7, %c0_8, %c0_9] : memref<32x32x32xbf16, #tpu.memory_space<vmem>>, vector<1x32x32xbf16>
    %13 = vector.shape_cast %12 : vector<1x32x32xbf16> to vector<32x32xbf16>
    %cst = arith.constant dense<0.000000e+00> : vector<8x32xf32>
    %14 = tpu.matmul %11, %13, %cst {dimension_numbers = #tpu.dot_dimension_numbers<[1], [0], [0], [1], [0, 0, 1, 1], [], []>} : vector<8x32xbf16>, vector<32x32xbf16>, vector<8x32xf32> -> vector<8x32xf32>
    %15 = vector.extract_strided_slice %7 {offsets = [0, 1], sizes = [8, 1], strides = [1, 1]} : vector<8x32xf32> to vector<8x1xf32>
    %16 = vector.broadcast %15 : vector<8x1xf32> to vector<8x32xf32>
    %17 = arith.mulf %16, %6 : vector<8x32xf32>
    %18 = arith.truncf %17 : vector<8x32xf32> to vector<8x32xbf16>
    %c1 = arith.constant 1 : index
    %c0_10 = arith.constant 0 : index
    %c0_11 = arith.constant 0 : index
    %19 = vector.load %arg3[%c1, %c0_10, %c0_11] : memref<32x32x32xbf16, #tpu.memory_space<vmem>>, vector<1x32x32xbf16>
    %20 = vector.shape_cast %19 : vector<1x32x32xbf16> to vector<32x32xbf16>
    %cst_12 = arith.constant dense<0.000000e+00> : vector<8x32xf32>
    %21 = tpu.matmul %18, %20, %cst_12 {dimension_numbers = #tpu.dot_dimension_numbers<[1], [0], [0], [1], [0, 0, 1, 1], [], []>} : vector<8x32xbf16>, vector<32x32xbf16>, vector<8x32xf32> -> vector<8x32xf32>
    %22 = arith.addf %14, %21 : vector<8x32xf32>
    %23 = vector.extract_strided_slice %7 {offsets = [0, 2], sizes = [8, 1], strides = [1, 1]} : vector<8x32xf32> to vector<8x1xf32>
    %24 = vector.broadcast %23 : vector<8x1xf32> to vector<8x32xf32>
    %25 = arith.mulf %24, %6 : vector<8x32xf32>
    %26 = arith.truncf %25 : vector<8x32xf32> to vector<8x32xbf16>
    %c2 = arith.constant 2 : index
    %c0_13 = arith.constant 0 : index
    %c0_14 = arith.constant 0 : index
    %27 = vector.load %arg3[%c2, %c0_13, %c0_14] : memref<32x32x32xbf16, #tpu.memory_space<vmem>>, vector<1x32x32xbf16>
    %28 = vector.shape_cast %27 : vector<1x32x32xbf16> to vector<32x32xbf16>
    %cst_15 = arith.constant dense<0.000000e+00> : vector<8x32xf32>
    %29 = tpu.matmul %26, %28, %cst_15 {dimension_numbers = #tpu.dot_dimension_numbers<[1], [0], [0], [1], [0, 0, 1, 1], [], []>} : vector<8x32xbf16>, vector<32x32xbf16>, vector<8x32xf32> -> vector<8x32xf32>
    %30 = arith.addf %22, %29 : vector<8x32xf32>
    %31 = vector.extract_strided_slice %7 {offsets = [0, 3], sizes = [8, 1], strides = [1, 1]} : vector<8x32xf32> to vector<8x1xf32>
    %32 = vector.broadcast %31 : vector<8x1xf32> to vector<8x32xf32>
    %33 = arith.mulf %32, %6 : vector<8x32xf32>
    %34 = arith.truncf %33 : vector<8x32xf32> to vector<8x32xbf16>
    %c3 = arith.constant 3 : index
    %c0_16 = arith.constant 0 : index
    %c0_17 = arith.constant 0 : index
    %35 = vector.load %arg3[%c3, %c0_16, %c0_17] : memref<32x32x32xbf16, #tpu.memory_space<vmem>>, vector<1x32x32xbf16>
    %36 = vector.shape_cast %35 : vector<1x32x32xbf16> to vector<32x32xbf16>
    %cst_18 = arith.constant dense<0.000000e+00> : vector<8x32xf32>
    %37 = tpu.matmul %34, %36, %cst_18 {dimension_numbers = #tpu.dot_dimension_numbers<[1], [0], [0], [1], [0, 0, 1, 1], [], []>} : vector<8x32xbf16>, vector<32x32xbf16>, vector<8x32xf32> -> vector<8x32xf32>
    %38 = arith.addf %30, %37 : vector<8x32xf32>
    %39 = vector.extract_strided_slice %7 {offsets = [0, 4], sizes = [8, 1], strides = [1, 1]} : vector<8x32xf32> to vector<8x1xf32>
    %40 = vector.broadcast %39 : vector<8x1xf32> to vector<8x32xf32>
    %41 = arith.mulf %40, %6 : vector<8x32xf32>
    %42 = arith.truncf %41 : vector<8x32xf32> to vector<8x32xbf16>
    %c4 = arith.constant 4 : index
    %c0_19 = arith.constant 0 : index
    %c0_20 = arith.constant 0 : index
    %43 = vector.load %arg3[%c4, %c0_19, %c0_20] : memref<32x32x32xbf16, #tpu.memory_space<vmem>>, vector<1x32x32xbf16>
    %44 = vector.shape_cast %43 : vector<1x32x32xbf16> to vector<32x32xbf16>
    %cst_21 = arith.constant dense<0.000000e+00> : vector<8x32xf32>
    %45 = tpu.matmul %42, %44, %cst_21 {dimension_numbers = #tpu.dot_dimension_numbers<[1], [0], [0], [1], [0, 0, 1, 1], [], []>} : vector<8x32xbf16>, vector<32x32xbf16>, vector<8x32xf32> -> vector<8x32xf32>
    %46 = arith.addf %38, %45 : vector<8x32xf32>
    %47 = vector.extract_strided_slice %7 {offsets = [0, 5], sizes = [8, 1], strides = [1, 1]} : vector<8x32xf32> to vector<8x1xf32>
    %48 = vector.broadcast %47 : vector<8x1xf32> to vector<8x32xf32>
    %49 = arith.mulf %48, %6 : vector<8x32xf32>
    %50 = arith.truncf %49 : vector<8x32xf32> to vector<8x32xbf16>
    %c5 = arith.constant 5 : index
    %c0_22 = arith.constant 0 : index
    %c0_23 = arith.constant 0 : index
    %51 = vector.load %arg3[%c5, %c0_22, %c0_23] : memref<32x32x32xbf16, #tpu.memory_space<vmem>>, vector<1x32x32xbf16>
    %52 = vector.shape_cast %51 : vector<1x32x32xbf16> to vector<32x32xbf16>
    %cst_24 = arith.constant dense<0.000000e+00> : vector<8x32xf32>
    %53 = tpu.matmul %50, %52, %cst_24 {dimension_numbers = #tpu.dot_dimension_numbers<[1], [0], [0], [1], [0, 0, 1, 1], [], []>} : vector<8x32xbf16>, vector<32x32xbf16>, vector<8x32xf32> -> vector<8x32xf32>
    %54 = arith.addf %46, %53 : vector<8x32xf32>
    %55 = vector.extract_strided_slice %7 {offsets = [0, 6], sizes = [8, 1], strides = [1, 1]} : vector<8x32xf32> to vector<8x1xf32>
    %56 = vector.broadcast %55 : vector<8x1xf32> to vector<8x32xf32>
    %57 = arith.mulf %56, %6 : vector<8x32xf32>
    %58 = arith.truncf %57 : vector<8x32xf32> to vector<8x32xbf16>
    %c6 = arith.constant 6 : index
    %c0_25 = arith.constant 0 : index
    %c0_26 = arith.constant 0 : index
    %59 = vector.load %arg3[%c6, %c0_25, %c0_26] : memref<32x32x32xbf16, #tpu.memory_space<vmem>>, vector<1x32x32xbf16>
    %60 = vector.shape_cast %59 : vector<1x32x32xbf16> to vector<32x32xbf16>
    %cst_27 = arith.constant dense<0.000000e+00> : vector<8x32xf32>
    %61 = tpu.matmul %58, %60, %cst_27 {dimension_numbers = #tpu.dot_dimension_numbers<[1], [0], [0], [1], [0, 0, 1, 1], [], []>} : vector<8x32xbf16>, vector<32x32xbf16>, vector<8x32xf32> -> vector<8x32xf32>
    %62 = arith.addf %54, %61 : vector<8x32xf32>
    %63 = vector.extract_strided_slice %7 {offsets = [0, 7], sizes = [8, 1], strides = [1, 1]} : vector<8x32xf32> to vector<8x1xf32>
    %64 = vector.broadcast %63 : vector<8x1xf32> to vector<8x32xf32>
    %65 = arith.mulf %64, %6 : vector<8x32xf32>
    %66 = arith.truncf %65 : vector<8x32xf32> to vector<8x32xbf16>
    %c7 = arith.constant 7 : index
    %c0_28 = arith.constant 0 : index
    %c0_29 = arith.constant 0 : index
    %67 = vector.load %arg3[%c7, %c0_28, %c0_29] : memref<32x32x32xbf16, #tpu.memory_space<vmem>>, vector<1x32x32xbf16>
    %68 = vector.shape_cast %67 : vector<1x32x32xbf16> to vector<32x32xbf16>
    %cst_30 = arith.constant dense<0.000000e+00> : vector<8x32xf32>
    %69 = tpu.matmul %66, %68, %cst_30 {dimension_numbers = #tpu.dot_dimension_numbers<[1], [0], [0], [1], [0, 0, 1, 1], [], []>} : vector<8x32xbf16>, vector<32x32xbf16>, vector<8x32xf32> -> vector<8x32xf32>
    %70 = arith.addf %62, %69 : vector<8x32xf32>
    %71 = vector.extract_strided_slice %7 {offsets = [0, 8], sizes = [8, 1], strides = [1, 1]} : vector<8x32xf32> to vector<8x1xf32>
    %72 = vector.broadcast %71 : vector<8x1xf32> to vector<8x32xf32>
    %73 = arith.mulf %72, %6 : vector<8x32xf32>
    %74 = arith.truncf %73 : vector<8x32xf32> to vector<8x32xbf16>
    %c8 = arith.constant 8 : index
    %c0_31 = arith.constant 0 : index
    %c0_32 = arith.constant 0 : index
    %75 = vector.load %arg3[%c8, %c0_31, %c0_32] : memref<32x32x32xbf16, #tpu.memory_space<vmem>>, vector<1x32x32xbf16>
    %76 = vector.shape_cast %75 : vector<1x32x32xbf16> to vector<32x32xbf16>
    %cst_33 = arith.constant dense<0.000000e+00> : vector<8x32xf32>
    %77 = tpu.matmul %74, %76, %cst_33 {dimension_numbers = #tpu.dot_dimension_numbers<[1], [0], [0], [1], [0, 0, 1, 1], [], []>} : vector<8x32xbf16>, vector<32x32xbf16>, vector<8x32xf32> -> vector<8x32xf32>
    %78 = arith.addf %70, %77 : vector<8x32xf32>
    %79 = vector.extract_strided_slice %7 {offsets = [0, 9], sizes = [8, 1], strides = [1, 1]} : vector<8x32xf32> to vector<8x1xf32>
    %80 = vector.broadcast %79 : vector<8x1xf32> to vector<8x32xf32>
    %81 = arith.mulf %80, %6 : vector<8x32xf32>
    %82 = arith.truncf %81 : vector<8x32xf32> to vector<8x32xbf16>
    %c9 = arith.constant 9 : index
    %c0_34 = arith.constant 0 : index
    %c0_35 = arith.constant 0 : index
    %83 = vector.load %arg3[%c9, %c0_34, %c0_35] : memref<32x32x32xbf16, #tpu.memory_space<vmem>>, vector<1x32x32xbf16>
    %84 = vector.shape_cast %83 : vector<1x32x32xbf16> to vector<32x32xbf16>
    %cst_36 = arith.constant dense<0.000000e+00> : vector<8x32xf32>
    %85 = tpu.matmul %82, %84, %cst_36 {dimension_numbers = #tpu.dot_dimension_numbers<[1], [0], [0], [1], [0, 0, 1, 1], [], []>} : vector<8x32xbf16>, vector<32x32xbf16>, vector<8x32xf32> -> vector<8x32xf32>
    %86 = arith.addf %78, %85 : vector<8x32xf32>
    %87 = vector.extract_strided_slice %7 {offsets = [0, 10], sizes = [8, 1], strides = [1, 1]} : vector<8x32xf32> to vector<8x1xf32>
    %88 = vector.broadcast %87 : vector<8x1xf32> to vector<8x32xf32>
    %89 = arith.mulf %88, %6 : vector<8x32xf32>
    %90 = arith.truncf %89 : vector<8x32xf32> to vector<8x32xbf16>
    %c10 = arith.constant 10 : index
    %c0_37 = arith.constant 0 : index
    %c0_38 = arith.constant 0 : index
    %91 = vector.load %arg3[%c10, %c0_37, %c0_38] : memref<32x32x32xbf16, #tpu.memory_space<vmem>>, vector<1x32x32xbf16>
    %92 = vector.shape_cast %91 : vector<1x32x32xbf16> to vector<32x32xbf16>
    %cst_39 = arith.constant dense<0.000000e+00> : vector<8x32xf32>
    %93 = tpu.matmul %90, %92, %cst_39 {dimension_numbers = #tpu.dot_dimension_numbers<[1], [0], [0], [1], [0, 0, 1, 1], [], []>} : vector<8x32xbf16>, vector<32x32xbf16>, vector<8x32xf32> -> vector<8x32xf32>
    %94 = arith.addf %86, %93 : vector<8x32xf32>
    %95 = vector.extract_strided_slice %7 {offsets = [0, 11], sizes = [8, 1], strides = [1, 1]} : vector<8x32xf32> to vector<8x1xf32>
    %96 = vector.broadcast %95 : vector<8x1xf32> to vector<8x32xf32>
    %97 = arith.mulf %96, %6 : vector<8x32xf32>
    %98 = arith.truncf %97 : vector<8x32xf32> to vector<8x32xbf16>
    %c11 = arith.constant 11 : index
    %c0_40 = arith.constant 0 : index
    %c0_41 = arith.constant 0 : index
    %99 = vector.load %arg3[%c11, %c0_40, %c0_41] : memref<32x32x32xbf16, #tpu.memory_space<vmem>>, vector<1x32x32xbf16>
    %100 = vector.shape_cast %99 : vector<1x32x32xbf16> to vector<32x32xbf16>
    %cst_42 = arith.constant dense<0.000000e+00> : vector<8x32xf32>
    %101 = tpu.matmul %98, %100, %cst_42 {dimension_numbers = #tpu.dot_dimension_numbers<[1], [0], [0], [1], [0, 0, 1, 1], [], []>} : vector<8x32xbf16>, vector<32x32xbf16>, vector<8x32xf32> -> vector<8x32xf32>
    %102 = arith.addf %94, %101 : vector<8x32xf32>
    %103 = vector.extract_strided_slice %7 {offsets = [0, 12], sizes = [8, 1], strides = [1, 1]} : vector<8x32xf32> to vector<8x1xf32>
    %104 = vector.broadcast %103 : vector<8x1xf32> to vector<8x32xf32>
    %105 = arith.mulf %104, %6 : vector<8x32xf32>
    %106 = arith.truncf %105 : vector<8x32xf32> to vector<8x32xbf16>
    %c12 = arith.constant 12 : index
    %c0_43 = arith.constant 0 : index
    %c0_44 = arith.constant 0 : index
    %107 = vector.load %arg3[%c12, %c0_43, %c0_44] : memref<32x32x32xbf16, #tpu.memory_space<vmem>>, vector<1x32x32xbf16>
    %108 = vector.shape_cast %107 : vector<1x32x32xbf16> to vector<32x32xbf16>
    %cst_45 = arith.constant dense<0.000000e+00> : vector<8x32xf32>
    %109 = tpu.matmul %106, %108, %cst_45 {dimension_numbers = #tpu.dot_dimension_numbers<[1], [0], [0], [1], [0, 0, 1, 1], [], []>} : vector<8x32xbf16>, vector<32x32xbf16>, vector<8x32xf32> -> vector<8x32xf32>
    %110 = arith.addf %102, %109 : vector<8x32xf32>
    %111 = vector.extract_strided_slice %7 {offsets = [0, 13], sizes = [8, 1], strides = [1, 1]} : vector<8x32xf32> to vector<8x1xf32>
    %112 = vector.broadcast %111 : vector<8x1xf32> to vector<8x32xf32>
    %113 = arith.mulf %112, %6 : vector<8x32xf32>
    %114 = arith.truncf %113 : vector<8x32xf32> to vector<8x32xbf16>
    %c13 = arith.constant 13 : index
    %c0_46 = arith.constant 0 : index
    %c0_47 = arith.constant 0 : index
    %115 = vector.load %arg3[%c13, %c0_46, %c0_47] : memref<32x32x32xbf16, #tpu.memory_space<vmem>>, vector<1x32x32xbf16>
    %116 = vector.shape_cast %115 : vector<1x32x32xbf16> to vector<32x32xbf16>
    %cst_48 = arith.constant dense<0.000000e+00> : vector<8x32xf32>
    %117 = tpu.matmul %114, %116, %cst_48 {dimension_numbers = #tpu.dot_dimension_numbers<[1], [0], [0], [1], [0, 0, 1, 1], [], []>} : vector<8x32xbf16>, vector<32x32xbf16>, vector<8x32xf32> -> vector<8x32xf32>
    %118 = arith.addf %110, %117 : vector<8x32xf32>
    %119 = vector.extract_strided_slice %7 {offsets = [0, 14], sizes = [8, 1], strides = [1, 1]} : vector<8x32xf32> to vector<8x1xf32>
    %120 = vector.broadcast %119 : vector<8x1xf32> to vector<8x32xf32>
    %121 = arith.mulf %120, %6 : vector<8x32xf32>
    %122 = arith.truncf %121 : vector<8x32xf32> to vector<8x32xbf16>
    %c14 = arith.constant 14 : index
    %c0_49 = arith.constant 0 : index
    %c0_50 = arith.constant 0 : index
    %123 = vector.load %arg3[%c14, %c0_49, %c0_50] : memref<32x32x32xbf16, #tpu.memory_space<vmem>>, vector<1x32x32xbf16>
    %124 = vector.shape_cast %123 : vector<1x32x32xbf16> to vector<32x32xbf16>
    %cst_51 = arith.constant dense<0.000000e+00> : vector<8x32xf32>
    %125 = tpu.matmul %122, %124, %cst_51 {dimension_numbers = #tpu.dot_dimension_numbers<[1], [0], [0], [1], [0, 0, 1, 1], [], []>} : vector<8x32xbf16>, vector<32x32xbf16>, vector<8x32xf32> -> vector<8x32xf32>
    %126 = arith.addf %118, %125 : vector<8x32xf32>
    %127 = vector.extract_strided_slice %7 {offsets = [0, 15], sizes = [8, 1], strides = [1, 1]} : vector<8x32xf32> to vector<8x1xf32>
    %128 = vector.broadcast %127 : vector<8x1xf32> to vector<8x32xf32>
    %129 = arith.mulf %128, %6 : vector<8x32xf32>
    %130 = arith.truncf %129 : vector<8x32xf32> to vector<8x32xbf16>
    %c15 = arith.constant 15 : index
    %c0_52 = arith.constant 0 : index
    %c0_53 = arith.constant 0 : index
    %131 = vector.load %arg3[%c15, %c0_52, %c0_53] : memref<32x32x32xbf16, #tpu.memory_space<vmem>>, vector<1x32x32xbf16>
    %132 = vector.shape_cast %131 : vector<1x32x32xbf16> to vector<32x32xbf16>
    %cst_54 = arith.constant dense<0.000000e+00> : vector<8x32xf32>
    %133 = tpu.matmul %130, %132, %cst_54 {dimension_numbers = #tpu.dot_dimension_numbers<[1], [0], [0], [1], [0, 0, 1, 1], [], []>} : vector<8x32xbf16>, vector<32x32xbf16>, vector<8x32xf32> -> vector<8x32xf32>
    %134 = arith.addf %126, %133 : vector<8x32xf32>
    %135 = vector.extract_strided_slice %7 {offsets = [0, 16], sizes = [8, 1], strides = [1, 1]} : vector<8x32xf32> to vector<8x1xf32>
    %136 = vector.broadcast %135 : vector<8x1xf32> to vector<8x32xf32>
    %137 = arith.mulf %136, %6 : vector<8x32xf32>
    %138 = arith.truncf %137 : vector<8x32xf32> to vector<8x32xbf16>
    %c16 = arith.constant 16 : index
    %c0_55 = arith.constant 0 : index
    %c0_56 = arith.constant 0 : index
    %139 = vector.load %arg3[%c16, %c0_55, %c0_56] : memref<32x32x32xbf16, #tpu.memory_space<vmem>>, vector<1x32x32xbf16>
    %140 = vector.shape_cast %139 : vector<1x32x32xbf16> to vector<32x32xbf16>
    %cst_57 = arith.constant dense<0.000000e+00> : vector<8x32xf32>
    %141 = tpu.matmul %138, %140, %cst_57 {dimension_numbers = #tpu.dot_dimension_numbers<[1], [0], [0], [1], [0, 0, 1, 1], [], []>} : vector<8x32xbf16>, vector<32x32xbf16>, vector<8x32xf32> -> vector<8x32xf32>
    %142 = arith.addf %134, %141 : vector<8x32xf32>
    %143 = vector.extract_strided_slice %7 {offsets = [0, 17], sizes = [8, 1], strides = [1, 1]} : vector<8x32xf32> to vector<8x1xf32>
    %144 = vector.broadcast %143 : vector<8x1xf32> to vector<8x32xf32>
    %145 = arith.mulf %144, %6 : vector<8x32xf32>
    %146 = arith.truncf %145 : vector<8x32xf32> to vector<8x32xbf16>
    %c17 = arith.constant 17 : index
    %c0_58 = arith.constant 0 : index
    %c0_59 = arith.constant 0 : index
    %147 = vector.load %arg3[%c17, %c0_58, %c0_59] : memref<32x32x32xbf16, #tpu.memory_space<vmem>>, vector<1x32x32xbf16>
    %148 = vector.shape_cast %147 : vector<1x32x32xbf16> to vector<32x32xbf16>
    %cst_60 = arith.constant dense<0.000000e+00> : vector<8x32xf32>
    %149 = tpu.matmul %146, %148, %cst_60 {dimension_numbers = #tpu.dot_dimension_numbers<[1], [0], [0], [1], [0, 0, 1, 1], [], []>} : vector<8x32xbf16>, vector<32x32xbf16>, vector<8x32xf32> -> vector<8x32xf32>
    %150 = arith.addf %142, %149 : vector<8x32xf32>
    %151 = vector.extract_strided_slice %7 {offsets = [0, 18], sizes = [8, 1], strides = [1, 1]} : vector<8x32xf32> to vector<8x1xf32>
    %152 = vector.broadcast %151 : vector<8x1xf32> to vector<8x32xf32>
    %153 = arith.mulf %152, %6 : vector<8x32xf32>
    %154 = arith.truncf %153 : vector<8x32xf32> to vector<8x32xbf16>
    %c18 = arith.constant 18 : index
    %c0_61 = arith.constant 0 : index
    %c0_62 = arith.constant 0 : index
    %155 = vector.load %arg3[%c18, %c0_61, %c0_62] : memref<32x32x32xbf16, #tpu.memory_space<vmem>>, vector<1x32x32xbf16>
    %156 = vector.shape_cast %155 : vector<1x32x32xbf16> to vector<32x32xbf16>
    %cst_63 = arith.constant dense<0.000000e+00> : vector<8x32xf32>
    %157 = tpu.matmul %154, %156, %cst_63 {dimension_numbers = #tpu.dot_dimension_numbers<[1], [0], [0], [1], [0, 0, 1, 1], [], []>} : vector<8x32xbf16>, vector<32x32xbf16>, vector<8x32xf32> -> vector<8x32xf32>
    %158 = arith.addf %150, %157 : vector<8x32xf32>
    %159 = vector.extract_strided_slice %7 {offsets = [0, 19], sizes = [8, 1], strides = [1, 1]} : vector<8x32xf32> to vector<8x1xf32>
    %160 = vector.broadcast %159 : vector<8x1xf32> to vector<8x32xf32>
    %161 = arith.mulf %160, %6 : vector<8x32xf32>
    %162 = arith.truncf %161 : vector<8x32xf32> to vector<8x32xbf16>
    %c19 = arith.constant 19 : index
    %c0_64 = arith.constant 0 : index
    %c0_65 = arith.constant 0 : index
    %163 = vector.load %arg3[%c19, %c0_64, %c0_65] : memref<32x32x32xbf16, #tpu.memory_space<vmem>>, vector<1x32x32xbf16>
    %164 = vector.shape_cast %163 : vector<1x32x32xbf16> to vector<32x32xbf16>
    %cst_66 = arith.constant dense<0.000000e+00> : vector<8x32xf32>
    %165 = tpu.matmul %162, %164, %cst_66 {dimension_numbers = #tpu.dot_dimension_numbers<[1], [0], [0], [1], [0, 0, 1, 1], [], []>} : vector<8x32xbf16>, vector<32x32xbf16>, vector<8x32xf32> -> vector<8x32xf32>
    %166 = arith.addf %158, %165 : vector<8x32xf32>
    %167 = vector.extract_strided_slice %7 {offsets = [0, 20], sizes = [8, 1], strides = [1, 1]} : vector<8x32xf32> to vector<8x1xf32>
    %168 = vector.broadcast %167 : vector<8x1xf32> to vector<8x32xf32>
    %169 = arith.mulf %168, %6 : vector<8x32xf32>
    %170 = arith.truncf %169 : vector<8x32xf32> to vector<8x32xbf16>
    %c20 = arith.constant 20 : index
    %c0_67 = arith.constant 0 : index
    %c0_68 = arith.constant 0 : index
    %171 = vector.load %arg3[%c20, %c0_67, %c0_68] : memref<32x32x32xbf16, #tpu.memory_space<vmem>>, vector<1x32x32xbf16>
    %172 = vector.shape_cast %171 : vector<1x32x32xbf16> to vector<32x32xbf16>
    %cst_69 = arith.constant dense<0.000000e+00> : vector<8x32xf32>
    %173 = tpu.matmul %170, %172, %cst_69 {dimension_numbers = #tpu.dot_dimension_numbers<[1], [0], [0], [1], [0, 0, 1, 1], [], []>} : vector<8x32xbf16>, vector<32x32xbf16>, vector<8x32xf32> -> vector<8x32xf32>
    %174 = arith.addf %166, %173 : vector<8x32xf32>
    %175 = vector.extract_strided_slice %7 {offsets = [0, 21], sizes = [8, 1], strides = [1, 1]} : vector<8x32xf32> to vector<8x1xf32>
    %176 = vector.broadcast %175 : vector<8x1xf32> to vector<8x32xf32>
    %177 = arith.mulf %176, %6 : vector<8x32xf32>
    %178 = arith.truncf %177 : vector<8x32xf32> to vector<8x32xbf16>
    %c21 = arith.constant 21 : index
    %c0_70 = arith.constant 0 : index
    %c0_71 = arith.constant 0 : index
    %179 = vector.load %arg3[%c21, %c0_70, %c0_71] : memref<32x32x32xbf16, #tpu.memory_space<vmem>>, vector<1x32x32xbf16>
    %180 = vector.shape_cast %179 : vector<1x32x32xbf16> to vector<32x32xbf16>
    %cst_72 = arith.constant dense<0.000000e+00> : vector<8x32xf32>
    %181 = tpu.matmul %178, %180, %cst_72 {dimension_numbers = #tpu.dot_dimension_numbers<[1], [0], [0], [1], [0, 0, 1, 1], [], []>} : vector<8x32xbf16>, vector<32x32xbf16>, vector<8x32xf32> -> vector<8x32xf32>
    %182 = arith.addf %174, %181 : vector<8x32xf32>
    %183 = vector.extract_strided_slice %7 {offsets = [0, 22], sizes = [8, 1], strides = [1, 1]} : vector<8x32xf32> to vector<8x1xf32>
    %184 = vector.broadcast %183 : vector<8x1xf32> to vector<8x32xf32>
    %185 = arith.mulf %184, %6 : vector<8x32xf32>
    %186 = arith.truncf %185 : vector<8x32xf32> to vector<8x32xbf16>
    %c22 = arith.constant 22 : index
    %c0_73 = arith.constant 0 : index
    %c0_74 = arith.constant 0 : index
    %187 = vector.load %arg3[%c22, %c0_73, %c0_74] : memref<32x32x32xbf16, #tpu.memory_space<vmem>>, vector<1x32x32xbf16>
    %188 = vector.shape_cast %187 : vector<1x32x32xbf16> to vector<32x32xbf16>
    %cst_75 = arith.constant dense<0.000000e+00> : vector<8x32xf32>
    %189 = tpu.matmul %186, %188, %cst_75 {dimension_numbers = #tpu.dot_dimension_numbers<[1], [0], [0], [1], [0, 0, 1, 1], [], []>} : vector<8x32xbf16>, vector<32x32xbf16>, vector<8x32xf32> -> vector<8x32xf32>
    %190 = arith.addf %182, %189 : vector<8x32xf32>
    %191 = vector.extract_strided_slice %7 {offsets = [0, 23], sizes = [8, 1], strides = [1, 1]} : vector<8x32xf32> to vector<8x1xf32>
    %192 = vector.broadcast %191 : vector<8x1xf32> to vector<8x32xf32>
    %193 = arith.mulf %192, %6 : vector<8x32xf32>
    %194 = arith.truncf %193 : vector<8x32xf32> to vector<8x32xbf16>
    %c23 = arith.constant 23 : index
    %c0_76 = arith.constant 0 : index
    %c0_77 = arith.constant 0 : index
    %195 = vector.load %arg3[%c23, %c0_76, %c0_77] : memref<32x32x32xbf16, #tpu.memory_space<vmem>>, vector<1x32x32xbf16>
    %196 = vector.shape_cast %195 : vector<1x32x32xbf16> to vector<32x32xbf16>
    %cst_78 = arith.constant dense<0.000000e+00> : vector<8x32xf32>
    %197 = tpu.matmul %194, %196, %cst_78 {dimension_numbers = #tpu.dot_dimension_numbers<[1], [0], [0], [1], [0, 0, 1, 1], [], []>} : vector<8x32xbf16>, vector<32x32xbf16>, vector<8x32xf32> -> vector<8x32xf32>
    %198 = arith.addf %190, %197 : vector<8x32xf32>
    %199 = vector.extract_strided_slice %7 {offsets = [0, 24], sizes = [8, 1], strides = [1, 1]} : vector<8x32xf32> to vector<8x1xf32>
    %200 = vector.broadcast %199 : vector<8x1xf32> to vector<8x32xf32>
    %201 = arith.mulf %200, %6 : vector<8x32xf32>
    %202 = arith.truncf %201 : vector<8x32xf32> to vector<8x32xbf16>
    %c24 = arith.constant 24 : index
    %c0_79 = arith.constant 0 : index
    %c0_80 = arith.constant 0 : index
    %203 = vector.load %arg3[%c24, %c0_79, %c0_80] : memref<32x32x32xbf16, #tpu.memory_space<vmem>>, vector<1x32x32xbf16>
    %204 = vector.shape_cast %203 : vector<1x32x32xbf16> to vector<32x32xbf16>
    %cst_81 = arith.constant dense<0.000000e+00> : vector<8x32xf32>
    %205 = tpu.matmul %202, %204, %cst_81 {dimension_numbers = #tpu.dot_dimension_numbers<[1], [0], [0], [1], [0, 0, 1, 1], [], []>} : vector<8x32xbf16>, vector<32x32xbf16>, vector<8x32xf32> -> vector<8x32xf32>
    %206 = arith.addf %198, %205 : vector<8x32xf32>
    %207 = vector.extract_strided_slice %7 {offsets = [0, 25], sizes = [8, 1], strides = [1, 1]} : vector<8x32xf32> to vector<8x1xf32>
    %208 = vector.broadcast %207 : vector<8x1xf32> to vector<8x32xf32>
    %209 = arith.mulf %208, %6 : vector<8x32xf32>
    %210 = arith.truncf %209 : vector<8x32xf32> to vector<8x32xbf16>
    %c25 = arith.constant 25 : index
    %c0_82 = arith.constant 0 : index
    %c0_83 = arith.constant 0 : index
    %211 = vector.load %arg3[%c25, %c0_82, %c0_83] : memref<32x32x32xbf16, #tpu.memory_space<vmem>>, vector<1x32x32xbf16>
    %212 = vector.shape_cast %211 : vector<1x32x32xbf16> to vector<32x32xbf16>
    %cst_84 = arith.constant dense<0.000000e+00> : vector<8x32xf32>
    %213 = tpu.matmul %210, %212, %cst_84 {dimension_numbers = #tpu.dot_dimension_numbers<[1], [0], [0], [1], [0, 0, 1, 1], [], []>} : vector<8x32xbf16>, vector<32x32xbf16>, vector<8x32xf32> -> vector<8x32xf32>
    %214 = arith.addf %206, %213 : vector<8x32xf32>
    %215 = vector.extract_strided_slice %7 {offsets = [0, 26], sizes = [8, 1], strides = [1, 1]} : vector<8x32xf32> to vector<8x1xf32>
    %216 = vector.broadcast %215 : vector<8x1xf32> to vector<8x32xf32>
    %217 = arith.mulf %216, %6 : vector<8x32xf32>
    %218 = arith.truncf %217 : vector<8x32xf32> to vector<8x32xbf16>
    %c26 = arith.constant 26 : index
    %c0_85 = arith.constant 0 : index
    %c0_86 = arith.constant 0 : index
    %219 = vector.load %arg3[%c26, %c0_85, %c0_86] : memref<32x32x32xbf16, #tpu.memory_space<vmem>>, vector<1x32x32xbf16>
    %220 = vector.shape_cast %219 : vector<1x32x32xbf16> to vector<32x32xbf16>
    %cst_87 = arith.constant dense<0.000000e+00> : vector<8x32xf32>
    %221 = tpu.matmul %218, %220, %cst_87 {dimension_numbers = #tpu.dot_dimension_numbers<[1], [0], [0], [1], [0, 0, 1, 1], [], []>} : vector<8x32xbf16>, vector<32x32xbf16>, vector<8x32xf32> -> vector<8x32xf32>
    %222 = arith.addf %214, %221 : vector<8x32xf32>
    %223 = vector.extract_strided_slice %7 {offsets = [0, 27], sizes = [8, 1], strides = [1, 1]} : vector<8x32xf32> to vector<8x1xf32>
    %224 = vector.broadcast %223 : vector<8x1xf32> to vector<8x32xf32>
    %225 = arith.mulf %224, %6 : vector<8x32xf32>
    %226 = arith.truncf %225 : vector<8x32xf32> to vector<8x32xbf16>
    %c27 = arith.constant 27 : index
    %c0_88 = arith.constant 0 : index
    %c0_89 = arith.constant 0 : index
    %227 = vector.load %arg3[%c27, %c0_88, %c0_89] : memref<32x32x32xbf16, #tpu.memory_space<vmem>>, vector<1x32x32xbf16>
    %228 = vector.shape_cast %227 : vector<1x32x32xbf16> to vector<32x32xbf16>
    %cst_90 = arith.constant dense<0.000000e+00> : vector<8x32xf32>
    %229 = tpu.matmul %226, %228, %cst_90 {dimension_numbers = #tpu.dot_dimension_numbers<[1], [0], [0], [1], [0, 0, 1, 1], [], []>} : vector<8x32xbf16>, vector<32x32xbf16>, vector<8x32xf32> -> vector<8x32xf32>
    %230 = arith.addf %222, %229 : vector<8x32xf32>
    %231 = vector.extract_strided_slice %7 {offsets = [0, 28], sizes = [8, 1], strides = [1, 1]} : vector<8x32xf32> to vector<8x1xf32>
    %232 = vector.broadcast %231 : vector<8x1xf32> to vector<8x32xf32>
    %233 = arith.mulf %232, %6 : vector<8x32xf32>
    %234 = arith.truncf %233 : vector<8x32xf32> to vector<8x32xbf16>
    %c28 = arith.constant 28 : index
    %c0_91 = arith.constant 0 : index
    %c0_92 = arith.constant 0 : index
    %235 = vector.load %arg3[%c28, %c0_91, %c0_92] : memref<32x32x32xbf16, #tpu.memory_space<vmem>>, vector<1x32x32xbf16>
    %236 = vector.shape_cast %235 : vector<1x32x32xbf16> to vector<32x32xbf16>
    %cst_93 = arith.constant dense<0.000000e+00> : vector<8x32xf32>
    %237 = tpu.matmul %234, %236, %cst_93 {dimension_numbers = #tpu.dot_dimension_numbers<[1], [0], [0], [1], [0, 0, 1, 1], [], []>} : vector<8x32xbf16>, vector<32x32xbf16>, vector<8x32xf32> -> vector<8x32xf32>
    %238 = arith.addf %230, %237 : vector<8x32xf32>
    %239 = vector.extract_strided_slice %7 {offsets = [0, 29], sizes = [8, 1], strides = [1, 1]} : vector<8x32xf32> to vector<8x1xf32>
    %240 = vector.broadcast %239 : vector<8x1xf32> to vector<8x32xf32>
    %241 = arith.mulf %240, %6 : vector<8x32xf32>
    %242 = arith.truncf %241 : vector<8x32xf32> to vector<8x32xbf16>
    %c29 = arith.constant 29 : index
    %c0_94 = arith.constant 0 : index
    %c0_95 = arith.constant 0 : index
    %243 = vector.load %arg3[%c29, %c0_94, %c0_95] : memref<32x32x32xbf16, #tpu.memory_space<vmem>>, vector<1x32x32xbf16>
    %244 = vector.shape_cast %243 : vector<1x32x32xbf16> to vector<32x32xbf16>
    %cst_96 = arith.constant dense<0.000000e+00> : vector<8x32xf32>
    %245 = tpu.matmul %242, %244, %cst_96 {dimension_numbers = #tpu.dot_dimension_numbers<[1], [0], [0], [1], [0, 0, 1, 1], [], []>} : vector<8x32xbf16>, vector<32x32xbf16>, vector<8x32xf32> -> vector<8x32xf32>
    %246 = arith.addf %238, %245 : vector<8x32xf32>
    %247 = vector.extract_strided_slice %7 {offsets = [0, 30], sizes = [8, 1], strides = [1, 1]} : vector<8x32xf32> to vector<8x1xf32>
    %248 = vector.broadcast %247 : vector<8x1xf32> to vector<8x32xf32>
    %249 = arith.mulf %248, %6 : vector<8x32xf32>
    %250 = arith.truncf %249 : vector<8x32xf32> to vector<8x32xbf16>
    %c30 = arith.constant 30 : index
    %c0_97 = arith.constant 0 : index
    %c0_98 = arith.constant 0 : index
    %251 = vector.load %arg3[%c30, %c0_97, %c0_98] : memref<32x32x32xbf16, #tpu.memory_space<vmem>>, vector<1x32x32xbf16>
    %252 = vector.shape_cast %251 : vector<1x32x32xbf16> to vector<32x32xbf16>
    %cst_99 = arith.constant dense<0.000000e+00> : vector<8x32xf32>
    %253 = tpu.matmul %250, %252, %cst_99 {dimension_numbers = #tpu.dot_dimension_numbers<[1], [0], [0], [1], [0, 0, 1, 1], [], []>} : vector<8x32xbf16>, vector<32x32xbf16>, vector<8x32xf32> -> vector<8x32xf32>
    %254 = arith.addf %246, %253 : vector<8x32xf32>
    %255 = vector.extract_strided_slice %7 {offsets = [0, 31], sizes = [8, 1], strides = [1, 1]} : vector<8x32xf32> to vector<8x1xf32>
    %256 = vector.broadcast %255 : vector<8x1xf32> to vector<8x32xf32>
    %257 = arith.mulf %256, %6 : vector<8x32xf32>
    %258 = arith.truncf %257 : vector<8x32xf32> to vector<8x32xbf16>
    %c31 = arith.constant 31 : index
    %c0_100 = arith.constant 0 : index
    %c0_101 = arith.constant 0 : index
    %259 = vector.load %arg3[%c31, %c0_100, %c0_101] : memref<32x32x32xbf16, #tpu.memory_space<vmem>>, vector<1x32x32xbf16>
    %260 = vector.shape_cast %259 : vector<1x32x32xbf16> to vector<32x32xbf16>
    %cst_102 = arith.constant dense<0.000000e+00> : vector<8x32xf32>
    %261 = tpu.matmul %258, %260, %cst_102 {dimension_numbers = #tpu.dot_dimension_numbers<[1], [0], [0], [1], [0, 0, 1, 1], [], []>} : vector<8x32xbf16>, vector<32x32xbf16>, vector<8x32xf32> -> vector<8x32xf32>
    %262 = arith.addf %254, %261 : vector<8x32xf32>
    %c0_103 = arith.constant 0 : index
    %c0_104 = arith.constant 0 : index
    %263 = vector.load %arg6[%c0_103, %c0_104] : memref<1x32xf32, #tpu.memory_space<vmem>>, vector<1x32xf32>
    %264 = vector.broadcast %263 : vector<1x32xf32> to vector<8x32xf32>
    %265 = arith.mulf %262, %264 : vector<8x32xf32>
    %c0_105 = arith.constant 0 : index
    %c0_106 = arith.constant 0 : index
    %266 = vector.load %arg7[%c0_105, %c0_106] : memref<1x32xf32, #tpu.memory_space<vmem>>, vector<1x32xf32>
    %267 = vector.broadcast %266 : vector<1x32xf32> to vector<8x32xf32>
    %268 = arith.addf %265, %267 : vector<8x32xf32>
    %c0_107 = arith.constant 0 : index
    %c0_108 = arith.constant 0 : index
    %269 = vector.load %arg8[%c0_107, %c0_108] : memref<8x32xf32, #tpu.memory_space<vmem>>, vector<8x32xf32>
    tpu.vector_store %arg8[%c0_107, %c0_108], %268 {strides = array<i32>} : memref<8x32xf32, #tpu.memory_space<vmem>>, vector<8x32xf32>,
    return
  }
  func.func @transform_0(%arg0: i32) -> (i32, i32) {
    %c0_i32 = arith.constant 0 : i32
    %c0_i32_0 = arith.constant 0 : i32
    return %arg0, %c0_i32 : i32, i32
  }
  func.func @transform_1(%arg0: i32) -> (i32, i32) {
    %c0_i32 = arith.constant 0 : i32
    %c0_i32_0 = arith.constant 0 : i32
    return %arg0, %c0_i32 : i32, i32
  }
  func.func @transform_2(%arg0: i32) -> (i32, i32, i32) {
    %c0_i32 = arith.constant 0 : i32
    %c0_i32_0 = arith.constant 0 : i32
    %c0_i32_1 = arith.constant 0 : i32
    %c0_i32_2 = arith.constant 0 : i32
    return %c0_i32, %c0_i32_0, %c0_i32_1 : i32, i32, i32
  }
  func.func @transform_3(%arg0: i32) -> (i32, i32) {
    %c0_i32 = arith.constant 0 : i32
    %c0_i32_0 = arith.constant 0 : i32
    %c0_i32_1 = arith.constant 0 : i32
    return %c0_i32, %c0_i32_0 : i32, i32
  }
  func.func @transform_4(%arg0: i32) -> (i32, i32) {
    %c0_i32 = arith.constant 0 : i32
    %c0_i32_0 = arith.constant 0 : i32
    %c0_i32_1 = arith.constant 0 : i32
    return %c0_i32, %c0_i32_0 : i32, i32
  }
  func.func @transform_5(%arg0: i32) -> (i32, i32) {
    %c0_i32 = arith.constant 0 : i32
    %c0_i32_0 = arith.constant 0 : i32
    %c0_i32_1 = arith.constant 0 : i32
    return %c0_i32, %c0_i32_0 : i32, i32
  }
  func.func @transform_6(%arg0: i32) -> (i32, i32) {
    %c0_i32 = arith.constant 0 : i32
    %c0_i32_0 = arith.constant 0 : i32
    %c0_i32_1 = arith.constant 0 : i32
    return %c0_i32, %c0_i32_0 : i32, i32
  }
  func.func @transform_7(%arg0: i32) -> (i32, i32) {
    %c0_i32 = arith.constant 0 : i32
    %c0_i32_0 = arith.constant 0 : i32
    return %arg0, %c0_i32 : i32, i32
  }
}

</mosaic_0001>

<llo_original>
// kernel: tuckertnt_forward.3
$region0: #{tuckertnt_forward.3}
  #allocation0 [shape = 'u32[]', space=smem, size = 0x4, offset = 0x4, fixed_abs, tag = 'smem constant byte address 0x4 - core index']
  #allocation1 [shape = 'u32[72,128]{1,0:T(1,128)}', space=vmem, size = 0x9000, scoped, tag = 'internal scratch']
  %s0 = inlined_call_operand.vmem [shape: f32[16,32], index: 0, kind: input, shape index: {}]
  %s1 = inlined_call_operand.vmem [shape: bf16[32,384], index: 1, kind: input, shape index: {}]
  %s2 = inlined_call_operand.hbm [shape: f32[16,384], index: 2, kind: output, shape index: {}]
  %s3 = sld [smem:[#allocation0]]
  $region82: #{tuckertnt_forward.3} parent=0
    _
  %s5 = ssub.s32 1, %s3
  %s6 = scalar_select 0, %s5, %s3
  $region1: #{tuckertnt_forward.3} parent=0
    #allocation2 [shape = 'u8[16384]{0}', space=vmem, size = 0x4000, scoped, tag = 'input window, operand 1']
    #allocation3 [shape = 'u8[16384]{0}', space=vmem, size = 0x4000, scoped, tag = 'output window, operand 0']
    #allocation4 [shape = 's32[2]{0}', space=sflag, size = 0x8, scoped, tag = 'scoped memory for tuckertnt_forward.3']
    %7 = vsyncpa [#allocation4], 0
    %s8 = scalar_lea.sflag [#allocation4], 1
    %9 = vsyncpa %s8, 0
    loop: start=0, step=1, limit=5
    $region2: #{tuckertnt_forward.3} parent=1 // loop_pre_header
      _
    $region3: #{tuckertnt_forward.3} parent=1 // loop_header
      %s11 = sphi 0, %s15
      %p12 = scmp.ge.s32.totalorder %s11, 5
      %s19 = sphi 0, %s19
      %s21 = sphi 0, %s19
      %s22 = sphi 0, %s21
      %s36 = sphi 0, %s22
      %s42 = sphi 0, %s44
      %s45 = sphi 0, %s42
      %s46 = sphi 0, %s45
      %s62 = sphi 0, %s46
      %s68 = sphi 0, %s70
      %s71 = sphi 0, %s68
      %s72 = sphi 0, %s71
      %s88 = sphi 0, %s72
    $region4: #{tuckertnt_forward.3} parent=1 // loop_header_branch
      %14 = sbr.rel (%p12) target = $region8
    $region5: #{tuckertnt_forward.3} parent=1 // loop_body
      %s16 = ssub.s32 %s11, 1
      %s17 = ssub.s32 %s11, 2
      %s18 = sadd.s32 %s11, 1
      %s20 = sadd.s32 %s19, 1
      %p23 = scmp.eq.s32.totalorder %s11, 2
      %p24 = scmp.ne.s32.totalorder %s19, %s21
      %p25 = scmp.eq.s32.totalorder %s11, 0
      %p26 = por %p24, %p25
      %p27 = scmp.ne.s32.totalorder %s19, %s21
      %p28 = scmp.eq.s32.totalorder %s16, 2
      %p29 = por %p27, %p28
      %p30 = scmp.ne.s32.totalorder %s21, %s22
      %p31 = scmp.eq.s32.totalorder %s16, 0
      %p32 = por %p30, %p31
      %p33 = scmp.ne.s32.totalorder %s21, %s22
      %p34 = scmp.eq.s32.totalorder %s17, 2
      %p35 = por %p33, %p34
      %p37 = scmp.ne.s32.totalorder %s22, %s36
      %p38 = scmp.eq.s32.totalorder %s17, 0
      %p39 = por %p37, %p38
      %s40 = ssub.s32 %s11, %s18
      %p41 = scmp.eq.s32.totalorder %s40, 0
      %s43 = sadd.s32 %s42, 1
      %s44 = scalar_select %p41, %s42, %s43
      %p47 = pneg %p41
      %p48 = scmp.eq.s32.totalorder %s11, 2
      %p49 = por %p47, %p48
      %p50 = scmp.ne.s32.totalorder %s42, %s45
      %p51 = scmp.eq.s32.totalorder %s11, 0
      %p52 = por %p50, %p51
      %p53 = scmp.ne.s32.totalorder %s42, %s45
      %p54 = scmp.eq.s32.totalorder %s16, 2
      %p55 = por %p53, %p54
      %p56 = scmp.ne.s32.totalorder %s45, %s46
      %p57 = scmp.eq.s32.totalorder %s16, 0
      %p58 = por %p56, %p57
      %p59 = scmp.ne.s32.totalorder %s45, %s46
      %p60 = scmp.eq.s32.totalorder %s17, 2
      %p61 = por %p59, %p60
      %p63 = scmp.ne.s32.totalorder %s46, %s62
      %p64 = scmp.eq.s32.totalorder %s17, 0
      %p65 = por %p63, %p64
      %s66 = ssub.s32 %s11, %s18
      %p67 = scmp.eq.s32.totalorder %s66, 0
      %s69 = sadd.s32 %s68, 1
      %s70 = scalar_select %p67, %s68, %s69
      %p73 = pneg %p67
      %p74 = scmp.eq.s32.totalorder %s11, 2
      %p75 = por %p73, %p74
      %p76 = scmp.ne.s32.totalorder %s68, %s71
      %p77 = scmp.eq.s32.totalorder %s11, 0
      %p78 = por %p76, %p77
      %p79 = scmp.ne.s32.totalorder %s68, %s71
      %p80 = scmp.eq.s32.totalorder %s16, 2
      %p81 = por %p79, %p80
      %p82 = scmp.ne.s32.totalorder %s71, %s72
      %p83 = scmp.eq.s32.totalorder %s16, 0
      %p84 = por %p82, %p83
      %p85 = scmp.ne.s32.totalorder %s71, %s72
      %p86 = scmp.eq.s32.totalorder %s17, 2
      %p87 = por %p85, %p86
      %p89 = scmp.ne.s32.totalorder %s72, %s88
      %p90 = scmp.eq.s32.totalorder %s17, 0
      %p91 = por %p89, %p90
      %p92 = scmp.le.s32.totalorder 1, %s11
      %p93 = scmp.lt.s32.totalorder %s11, 4
      %p94 = pnand %p92, %p93
      %p95 = pneg %p94
      // Predicated region
      $region9: #{tuckertnt_forward.3} parent=5 // pred_check
        _
      $region10: #{tuckertnt_forward.3} parent=5 // pred_check_branch
        %97 = sbr.rel (%p94) target = $region12
      $region11: #{tuckertnt_forward.3} parent=5 // pred_region
        %s98 = ssub.s32 %s11, 1
        // Predicated region
        $region13: #{tuckertnt_forward.3} parent=11 // pred_check
          %p99 = pneg %p32
        $region14: #{tuckertnt_forward.3} parent=11 // pred_check_branch
          %101 = sbr.rel (%p99) target = $region16
        $region15: #{tuckertnt_forward.3} parent=11 // pred_region
          _
        $region16: #{tuckertnt_forward.3} parent=11 // pred_fallthru
          _
      $region12: #{tuckertnt_forward.3} parent=5 // pred_fallthru
        _
      %p102 = scmp.lt.s32.totalorder %s11, 3
      // Predicated region
      $region17: #{tuckertnt_forward.3} parent=5 // pred_check
        %p103 = pneg %p102
      $region18: #{tuckertnt_forward.3} parent=5 // pred_check_branch
        %105 = sbr.rel (%p103) target = $region20
      $region19: #{tuckertnt_forward.3} parent=5 // pred_region
        // Predicated region
        $region21: #{tuckertnt_forward.3} parent=19 // pred_check
          %p106 = pneg %p52
        $region22: #{tuckertnt_forward.3} parent=19 // pred_check_branch
          %108 = sbr.rel (%p106) target = $region24
        $region23: #{tuckertnt_forward.3} parent=19 // pred_region
          %s109 = sand.u32 %s42, 1
          %s110 = sand.u32 %s42, 1
          %s111 = smul.addr %s110, 16
          %s112 = scalar_lea.vmem [#allocation2], %s111
          %s113 = smul.addr %s11, 4
          %s114 = scalar_lea.vmem %s1, %s113
          // Predicated region
          $region25: #{tuckertnt_forward.3} parent=23 // pred_check
            _
          $region26: #{tuckertnt_forward.3} parent=23 // pred_check_branch
            %116 = sbr.rel (0) target = $region28
          $region27: #{tuckertnt_forward.3} parent=23 // pred_region
            // Predicated region
            $region29: #{tuckertnt_forward.3} parent=27 // pred_check
              _
            $region30: #{tuckertnt_forward.3} parent=27 // pred_check_branch
              %118 = sbr.rel target = $region32
            $region31: #{tuckertnt_forward.3} parent=27 // pred_region
              // Predicated region
              $region44: #{tuckertnt_forward.3} parent=31 // pred_check
                _
              $region45: #{tuckertnt_forward.3} parent=31 // pred_check_branch
                %140 = sbr.rel (0) target = $region47
              $region46: #{tuckertnt_forward.3} parent=31 // pred_region
                loop: start=0, step=1, limit=1
                $region48: #{tuckertnt_forward.3} parent=46 // loop_pre_header
                  _
                $region49: #{tuckertnt_forward.3} parent=46 // loop_header
                  %s142 = sphi 0, %s146
                  %p143 = scmp.ge.s32.totalorder %s142, 1
                  %s147 = sphi %s114, %s114
                  %s148 = sphi %s112, %s112
                $region50: #{tuckertnt_forward.3} parent=46 // loop_header_branch
                  %145 = sbr.rel (%p143) target = $region54
                $region51: #{tuckertnt_forward.3} parent=46 // loop_body
                  _
                $region52: #{tuckertnt_forward.3} parent=46 // loop_footer
                  %s146 = sadd.s32 1, %s142
                $region53: #{tuckertnt_forward.3} parent=46 // loop_footer_branch
                  %141 = sbr.rel target = $region49
                $region54: #{tuckertnt_forward.3} parent=46 // loop_exit
                  _
                %s150 = ssub.s32 16, 1
                loop: start=0, step=1, limit=1
                $region55: #{tuckertnt_forward.3} parent=46 // loop_pre_header
                  _
                $region56: #{tuckertnt_forward.3} parent=46 // loop_header
                  %s152 = sphi 0, %s156
                  %p153 = scmp.ge.s32.totalorder %s152, 1
                  %s157 = sphi %s114, %s114
                  %s158 = sphi %s112, %s112
                $region57: #{tuckertnt_forward.3} parent=46 // loop_header_branch
                  %155 = sbr.rel (%p153) target = $region61
                $region58: #{tuckertnt_forward.3} parent=46 // loop_body
                  %v159 = vld [vmem:[%s157] sm:%s150]
                  %160 = vst [vmem:[%s158] sm:%s150] %v159
                  %v161 = vld [vmem:[%s157 + $0xc] sm:%s150]
                  %162 = vst [vmem:[%s158 + $0x4] sm:%s150] %v161
                  %v163 = vld [vmem:[%s157 + $0x18] sm:%s150]
                  %164 = vst [vmem:[%s158 + $0x8] sm:%s150] %v163
                  %v165 = vld [vmem:[%s157 + $0x24] sm:%s150]
                  %166 = vst [vmem:[%s158 + $0xc] sm:%s150] %v165
                $region59: #{tuckertnt_forward.3} parent=46 // loop_footer
                  %s156 = sadd.s32 1, %s152
                $region60: #{tuckertnt_forward.3} parent=46 // loop_footer_branch
                  %151 = sbr.rel target = $region56
                $region61: #{tuckertnt_forward.3} parent=46 // loop_exit
                  _
              $region47: #{tuckertnt_forward.3} parent=31 // pred_fallthru
                _
            $region32: #{tuckertnt_forward.3} parent=27 // pred_fallthru
              _
            // Predicated region
            $region33: #{tuckertnt_forward.3} parent=27 // pred_check
              _
            $region34: #{tuckertnt_forward.3} parent=27 // pred_check_branch
              %120 = sbr.rel (0) target = $region36
            $region35: #{tuckertnt_forward.3} parent=27 // pred_region
              %s122 = ssub.s32 16, 1
              loop: start=0, step=1, limit=1
              $region37: #{tuckertnt_forward.3} parent=35 // loop_pre_header
                _
              $region38: #{tuckertnt_forward.3} parent=35 // loop_header
                %s124 = sphi 0, %s128
                %p125 = scmp.ge.s32.totalorder %s124, 1
                %s129 = sphi %s114, %s114
                %s130 = sphi %s112, %s112
              $region39: #{tuckertnt_forward.3} parent=35 // loop_header_branch
                %127 = sbr.rel (%p125) target = $region43
              $region40: #{tuckertnt_forward.3} parent=35 // loop_body
                %v131 = vld [vmem:[%s129] sm:%s122]
                %132 = vst [vmem:[%s130] sm:%s122] %v131
                %v133 = vld [vmem:[%s129 + $0xc] sm:%s122]
                %134 = vst [vmem:[%s130 + $0x4] sm:%s122] %v133
                %v135 = vld [vmem:[%s129 + $0x18] sm:%s122]
                %136 = vst [vmem:[%s130 + $0x8] sm:%s122] %v135
                %v137 = vld [vmem:[%s129 + $0x24] sm:%s122]
                %138 = vst [vmem:[%s130 + $0xc] sm:%s122] %v137
              $region41: #{tuckertnt_forward.3} parent=35 // loop_footer
                %s128 = sadd.s32 1, %s124
              $region42: #{tuckertnt_forward.3} parent=35 // loop_footer_branch
                %123 = sbr.rel target = $region38
              $region43: #{tuckertnt_forward.3} parent=35 // loop_exit
                _
            $region36: #{tuckertnt_forward.3} parent=27 // pred_fallthru
              _
          $region28: #{tuckertnt_forward.3} parent=23 // pred_fallthru
            _
          %167 = vnop
        $region24: #{tuckertnt_forward.3} parent=19 // pred_fallthru
          _
      $region20: #{tuckertnt_forward.3} parent=5 // pred_fallthru
        _
      %p168 = scmp.le.s32.totalorder 1, %s11
      %p169 = scmp.lt.s32.totalorder %s11, 4
      %p170 = pnand %p168, %p169
      %p171 = pneg %p170
      // Predicated region
      $region62: #{tuckertnt_forward.3} parent=5 // pred_check
        _
      $region63: #{tuckertnt_forward.3} parent=5 // pred_check_branch
        %173 = sbr.rel (%p170) target = $region65
      $region64: #{tuckertnt_forward.3} parent=5 // pred_region
        %s174 = ssub.s32 %s11, 1
        %s175 = sand.u32 %s45, 1
        %s176 = sand.u32 %s45, 1
        %s177 = smul.addr %s176, 16
        %s178 = scalar_lea.vmem [#allocation2], %s177
        // Predicated region
        $region66: #{tuckertnt_forward.3} parent=64 // pred_check
          %p179 = pneg %p58
        $region67: #{tuckertnt_forward.3} parent=64 // pred_check_branch
          %181 = sbr.rel (%p179) target = $region69
        $region68: #{tuckertnt_forward.3} parent=64 // pred_region
          _
        $region69: #{tuckertnt_forward.3} parent=64 // pred_fallthru
          _
        %p182 = pneg %p32
        %p183 = pneg %p29
        %s184 = sand.u32 %s45, 1
        %s185 = sand.u32 %s45, 1
        %s186 = smul.addr %s185, 16
        %s187 = scalar_lea.vmem [#allocation2], %s186
        %p188 = pneg %p58
        %p189 = pneg %p55
        %p190 = pneg %p84
        %p191 = pneg %p81
        %s192 = sand.u32 %s71, 1
        %s193 = scalar_lea.sflag [#allocation4], %s192
        %s194 = sand.u32 %s71, 1
        %s195 = smul.addr %s194, 16
        %s196 = scalar_lea.vmem [#allocation3], %s195
        %v198 = vld [vmem:[%s0] sm:$0xff]
        %v199 = vld [vmem:[%s0 + $0x8] sm:$0xff]
        %v200 = vpack.c.bf16 %v199, %v198
        %v201 = vld [vmem:[%s178] sm:$0xf]
        %v202 = vld [vmem:[%s178 + $0x4] sm:$0xf]
        %v203 = vld [vmem:[%s178 + $0x8] sm:$0xf]
        %v204 = vld [vmem:[%s178 + $0xc] sm:$0xf]
        %v209 = vunpack.c.l.b16 %v201
        %v210 = vunpack.c.l.b16 %v202
        %v211 = vunpack.c.l.b16 %v203
        %v212 = vunpack.c.l.b16 %v204
        %v213 = vpack.c.b16 %v210, %v209
        %v214 = vpack.c.b16 %v212, %v211
        %vm217 = vcmask 261120
        %v219 = vsel %vm217, %v200, 0
        %221 = vmatpush.bf16.msra.mxu0 0
        %222 = vmatpush.bf16.msra.mxu0 0
        %223 = vmatpush.bf16.msra.mxu0 0
        %224 = vmatpush.bf16.msra.mxu0 0
        %225 = vmatpush.bf16.msra.mxu0 0
        %226 = vmatpush.bf16.msra.mxu0 0
        %227 = vmatpush.bf16.msra.mxu0 %v214
        %228 = vmatpush.bf16.msra.mxu0 %v213
        %229 = vmatmul.bf16.gmra.mxu0 %v219
        %v230 = vpop.f32.mrf.mxu0
        %v231 = vadd.f32 0.0, %v230
        %v232 = vpop.f32.mrf.mxu0
        %v233 = vadd.f32 0.0, %v232
        %234 = vdwg.mxu0
        %235 = vst [vmem:[%s196] sm:$0xff] %v231
        %236 = vst [vmem:[%s196 + $0x8] sm:$0xff] %v233
        %s237 = sand.u32 %s71, 1
        %s238 = scalar_lea.sflag [#allocation4], %s237
        %s239 = sand.u32 %s71, 1
        %s240 = smul.addr %s239, 16
        %s241 = scalar_lea.vmem [#allocation3], %s240
        // Predicated region
        $region70: #{tuckertnt_forward.3} parent=64 // pred_check
          %p242 = pneg %p81
        $region71: #{tuckertnt_forward.3} parent=64 // pred_check_branch
          %244 = sbr.rel (%p242) target = $region73
        $region72: #{tuckertnt_forward.3} parent=64 // pred_region
          %246 = vsyncadd %s238, 0
          %s247 = smul.addr %s16, 8
          %s248 = scalar_lea.hbm %s2, %s247
          %s249 = sshll.u32 %s241, 4
          %s250 = int_to_ptr.vmem [resolvable:$true] %s249
          %s251 = sshll.u32 %s248, 4
          %s252 = int_to_ptr.hbm [resolvable:$true] %s251
          %257 = dma.vmem_to_hbm [thread:$0]  %s250, 256, %s252, %s238, 128, 384, 8
        $region73: #{tuckertnt_forward.3} parent=64 // pred_fallthru
          _
      $region65: #{tuckertnt_forward.3} parent=5 // pred_fallthru
        _
      %p258 = scmp.le.s32.totalorder 2, %s11
      // Predicated region
      $region74: #{tuckertnt_forward.3} parent=5 // pred_check
        %p259 = pneg %p258
      $region75: #{tuckertnt_forward.3} parent=5 // pred_check_branch
        %261 = sbr.rel (%p259) target = $region77
      $region76: #{tuckertnt_forward.3} parent=5 // pred_region
        %s262 = ssub.s32 %s11, 2
        // Predicated region
        $region78: #{tuckertnt_forward.3} parent=76 // pred_check
          %p263 = pneg %p87
        $region79: #{tuckertnt_forward.3} parent=76 // pred_check_branch
          %265 = sbr.rel (%p263) target = $region81
        $region80: #{tuckertnt_forward.3} parent=76 // pred_region
          %s266 = sand.u32 %s72, 1
          %s267 = scalar_lea.sflag [#allocation4], %s266
          %s268 = sand.u32 %s72, 1
          %s269 = smul.addr %s268, 16
          %s270 = scalar_lea.vmem [#allocation3], %s269
          %272 = dma.done %s267, 256
        $region81: #{tuckertnt_forward.3} parent=76 // pred_fallthru
          _
      $region77: #{tuckertnt_forward.3} parent=5 // pred_fallthru
        _
    $region6: #{tuckertnt_forward.3} parent=1 // loop_footer
      %s15 = sadd.s32 1, %s11
    $region7: #{tuckertnt_forward.3} parent=1 // loop_footer_branch
      %10 = sbr.rel target = $region3
    $region8: #{tuckertnt_forward.3} parent=1 // loop_exit
      _
    %273 = vsyncpa [#allocation4], 1
    %s274 = scalar_lea.sflag [#allocation4], 1
    %275 = vsyncpa %s274, 1

// kernel: tuckertnt_forward.2
$region0: #{tuckertnt_forward.2}
  #allocation0 [shape = 'u32[]', space=smem, size = 0x4, offset = 0x4, fixed_abs, tag = 'smem constant byte address 0x4 - core index']
  #allocation1 [shape = 'u32[72,128]{1,0:T(1,128)}', space=vmem, size = 0x9000, scoped, tag = 'internal scratch']
  %s0 = inlined_call_operand.vmem [shape: f32[16,32], index: 0, kind: input, shape index: {}]
  %s1 = inlined_call_operand.vmem [shape: f32[16,32], index: 1, kind: input, shape index: {}]
  %s2 = inlined_call_operand.hbm [shape: bf16[32,32,32], index: 2, kind: input, shape index: {}]
  %s3 = inlined_call_operand.vmem [shape: f32[1,32], index: 3, kind: input, shape index: {}, may-alias: {3,5}]
  %s4 = inlined_call_operand.vmem [shape: f32[1,32], index: 4, kind: input, shape index: {}, may-alias: {4,6}]
  %s5 = inlined_call_operand.vmem [shape: f32[1,32], index: 5, kind: input, shape index: {}, may-alias: {3,5}]
  %s6 = inlined_call_operand.vmem [shape: f32[1,32], index: 6, kind: input, shape index: {}, may-alias: {4,6}]
  %s7 = inlined_call_operand.vmem [shape: f32[16,32], index: 7, kind: output, shape index: {}]
  %s8 = sld [smem:[#allocation0]]
  $region65: #{tuckertnt_forward.2} parent=0
    _
  %s10 = ssub.s32 1, %s8
  %s11 = scalar_select 0, %s10, %s8
  $region1: #{tuckertnt_forward.2} parent=0
    #allocation2 [shape = 'u8[262144]{0}', space=vmem, size = 0x40000, scoped, tag = 'input window, operand 2, single buffered']
    #allocation3 [shape = 's32[2]{0}', space=sflag, size = 0x8, scoped, tag = 'scoped memory for tuckertnt_forward.2']
    %12 = vsyncpa [#allocation3], 0
    loop: start=0, step=1, limit=4
    $region2: #{tuckertnt_forward.2} parent=1 // loop_pre_header
      _
    $region3: #{tuckertnt_forward.2} parent=1 // loop_header
      %s14 = sphi 0, %s18
      %p15 = scmp.ge.s32.totalorder %s14, 4
      %s24 = sphi 0, %s26
      %s27 = sphi 0, %s24
      %s28 = sphi 0, %s27
      %s44 = sphi 0, %s28
      %s50 = sphi 0, %s52
      %s53 = sphi 0, %s50
      %s54 = sphi 0, %s53
      %s70 = sphi 0, %s54
      %s74 = sphi 0, %s74
      %s76 = sphi 0, %s74
      %s77 = sphi 0, %s76
      %s91 = sphi 0, %s77
      %s95 = sphi 0, %s95
      %s97 = sphi 0, %s95
      %s98 = sphi 0, %s97
      %s112 = sphi 0, %s98
      %s116 = sphi 0, %s116
      %s118 = sphi 0, %s116
      %s119 = sphi 0, %s118
      %s133 = sphi 0, %s119
      %s137 = sphi 0, %s137
      %s139 = sphi 0, %s137
      %s140 = sphi 0, %s139
      %s154 = sphi 0, %s140
      %s158 = sphi 0, %s158
      %s160 = sphi 0, %s158
      %s161 = sphi 0, %s160
      %s175 = sphi 0, %s161
      %s181 = sphi 0, %s183
      %s184 = sphi 0, %s181
      %s185 = sphi 0, %s184
      %s201 = sphi 0, %s185
    $region4: #{tuckertnt_forward.2} parent=1 // loop_header_branch
      %17 = sbr.rel (%p15) target = $region8
    $region5: #{tuckertnt_forward.2} parent=1 // loop_body
      %s19 = ssub.s32 %s14, 1
      %s20 = ssub.s32 %s14, 2
      %s21 = sadd.s32 %s14, 1
      %s22 = ssub.s32 %s14, %s21
      %p23 = scmp.eq.s32.totalorder %s22, 0
      %s25 = sadd.s32 %s24, 1
      %s26 = scalar_select %p23, %s24, %s25
      %p29 = pneg %p23
      %p30 = scmp.eq.s32.totalorder %s14, 1
      %p31 = por %p29, %p30
      %p32 = scmp.ne.s32.totalorder %s24, %s27
      %p33 = scmp.eq.s32.totalorder %s14, 0
      %p34 = por %p32, %p33
      %p35 = scmp.ne.s32.totalorder %s24, %s27
      %p36 = scmp.eq.s32.totalorder %s19, 1
      %p37 = por %p35, %p36
      %p38 = scmp.ne.s32.totalorder %s27, %s28
      %p39 = scmp.eq.s32.totalorder %s19, 0
      %p40 = por %p38, %p39
      %p41 = scmp.ne.s32.totalorder %s27, %s28
      %p42 = scmp.eq.s32.totalorder %s20, 1
      %p43 = por %p41, %p42
      %p45 = scmp.ne.s32.totalorder %s28, %s44
      %p46 = scmp.eq.s32.totalorder %s20, 0
      %p47 = por %p45, %p46
      %s48 = ssub.s32 %s14, %s21
      %p49 = scmp.eq.s32.totalorder %s48, 0
      %s51 = sadd.s32 %s50, 1
      %s52 = scalar_select %p49, %s50, %s51
      %p55 = pneg %p49
      %p56 = scmp.eq.s32.totalorder %s14, 1
      %p57 = por %p55, %p56
      %p58 = scmp.ne.s32.totalorder %s50, %s53
      %p59 = scmp.eq.s32.totalorder %s14, 0
      %p60 = por %p58, %p59
      %p61 = scmp.ne.s32.totalorder %s50, %s53
      %p62 = scmp.eq.s32.totalorder %s19, 1
      %p63 = por %p61, %p62
      %p64 = scmp.ne.s32.totalorder %s53, %s54
      %p65 = scmp.eq.s32.totalorder %s19, 0
      %p66 = por %p64, %p65
      %p67 = scmp.ne.s32.totalorder %s53, %s54
      %p68 = scmp.eq.s32.totalorder %s20, 1
      %p69 = por %p67, %p68
      %p71 = scmp.ne.s32.totalorder %s54, %s70
      %p72 = scmp.eq.s32.totalorder %s20, 0
      %p73 = por %p71, %p72
      %s75 = sadd.s32 %s74, 1
      %p78 = scmp.eq.s32.totalorder %s14, 1
      %p79 = scmp.ne.s32.totalorder %s74, %s76
      %p80 = scmp.eq.s32.totalorder %s14, 0
      %p81 = por %p79, %p80
      %p82 = scmp.ne.s32.totalorder %s74, %s76
      %p83 = scmp.eq.s32.totalorder %s19, 1
      %p84 = por %p82, %p83
      %p85 = scmp.ne.s32.totalorder %s76, %s77
      %p86 = scmp.eq.s32.totalorder %s19, 0
      %p87 = por %p85, %p86
      %p88 = scmp.ne.s32.totalorder %s76, %s77
      %p89 = scmp.eq.s32.totalorder %s20, 1
      %p90 = por %p88, %p89
      %p92 = scmp.ne.s32.totalorder %s77, %s91
      %p93 = scmp.eq.s32.totalorder %s20, 0
      %p94 = por %p92, %p93
      %s96 = sadd.s32 %s95, 1
      %p99 = scmp.eq.s32.totalorder %s14, 1
      %p100 = scmp.ne.s32.totalorder %s95, %s97
      %p101 = scmp.eq.s32.totalorder %s14, 0
      %p102 = por %p100, %p101
      %p103 = scmp.ne.s32.totalorder %s95, %s97
      %p104 = scmp.eq.s32.totalorder %s19, 1
      %p105 = por %p103, %p104
      %p106 = scmp.ne.s32.totalorder %s97, %s98
      %p107 = scmp.eq.s32.totalorder %s19, 0
      %p108 = por %p106, %p107
      %p109 = scmp.ne.s32.totalorder %s97, %s98
      %p110 = scmp.eq.s32.totalorder %s20, 1
      %p111 = por %p109, %p110
      %p113 = scmp.ne.s32.totalorder %s98, %s112
      %p114 = scmp.eq.s32.totalorder %s20, 0
      %p115 = por %p113, %p114
      %s117 = sadd.s32 %s116, 1
      %p120 = scmp.eq.s32.totalorder %s14, 1
      %p121 = scmp.ne.s32.totalorder %s116, %s118
      %p122 = scmp.eq.s32.totalorder %s14, 0
      %p123 = por %p121, %p122
      %p124 = scmp.ne.s32.totalorder %s116, %s118
      %p125 = scmp.eq.s32.totalorder %s19, 1
      %p126 = por %p124, %p125
      %p127 = scmp.ne.s32.totalorder %s118, %s119
      %p128 = scmp.eq.s32.totalorder %s19, 0
      %p129 = por %p127, %p128
      %p130 = scmp.ne.s32.totalorder %s118, %s119
      %p131 = scmp.eq.s32.totalorder %s20, 1
      %p132 = por %p130, %p131
      %p134 = scmp.ne.s32.totalorder %s119, %s133
      %p135 = scmp.eq.s32.totalorder %s20, 0
      %p136 = por %p134, %p135
      %s138 = sadd.s32 %s137, 1
      %p141 = scmp.eq.s32.totalorder %s14, 1
      %p142 = scmp.ne.s32.totalorder %s137, %s139
      %p143 = scmp.eq.s32.totalorder %s14, 0
      %p144 = por %p142, %p143
      %p145 = scmp.ne.s32.totalorder %s137, %s139
      %p146 = scmp.eq.s32.totalorder %s19, 1
      %p147 = por %p145, %p146
      %p148 = scmp.ne.s32.totalorder %s139, %s140
      %p149 = scmp.eq.s32.totalorder %s19, 0
      %p150 = por %p148, %p149
      %p151 = scmp.ne.s32.totalorder %s139, %s140
      %p152 = scmp.eq.s32.totalorder %s20, 1
      %p153 = por %p151, %p152
      %p155 = scmp.ne.s32.totalorder %s140, %s154
      %p156 = scmp.eq.s32.totalorder %s20, 0
      %p157 = por %p155, %p156
      %s159 = sadd.s32 %s158, 1
      %p162 = scmp.eq.s32.totalorder %s14, 1
      %p163 = scmp.ne.s32.totalorder %s158, %s160
      %p164 = scmp.eq.s32.totalorder %s14, 0
      %p165 = por %p163, %p164
      %p166 = scmp.ne.s32.totalorder %s158, %s160
      %p167 = scmp.eq.s32.totalorder %s19, 1
      %p168 = por %p166, %p167
      %p169 = scmp.ne.s32.totalorder %s160, %s161
      %p170 = scmp.eq.s32.totalorder %s19, 0
      %p171 = por %p169, %p170
      %p172 = scmp.ne.s32.totalorder %s160, %s161
      %p173 = scmp.eq.s32.totalorder %s20, 1
      %p174 = por %p172, %p173
      %p176 = scmp.ne.s32.totalorder %s161, %s175
      %p177 = scmp.eq.s32.totalorder %s20, 0
      %p178 = por %p176, %p177
      %s179 = ssub.s32 %s14, %s21
      %p180 = scmp.eq.s32.totalorder %s179, 0
      %s182 = sadd.s32 %s181, 1
      %s183 = scalar_select %p180, %s181, %s182
      %p186 = pneg %p180
      %p187 = scmp.eq.s32.totalorder %s14, 1
      %p188 = por %p186, %p187
      %p189 = scmp.ne.s32.totalorder %s181, %s184
      %p190 = scmp.eq.s32.totalorder %s14, 0
      %p191 = por %p189, %p190
      %p192 = scmp.ne.s32.totalorder %s181, %s184
      %p193 = scmp.eq.s32.totalorder %s19, 1
      %p194 = por %p192, %p193
      %p195 = scmp.ne.s32.totalorder %s184, %s185
      %p196 = scmp.eq.s32.totalorder %s19, 0
      %p197 = por %p195, %p196
      %p198 = scmp.ne.s32.totalorder %s184, %s185
      %p199 = scmp.eq.s32.totalorder %s20, 1
      %p200 = por %p198, %p199
      %p202 = scmp.ne.s32.totalorder %s185, %s201
      %p203 = scmp.eq.s32.totalorder %s20, 0
      %p204 = por %p202, %p203
      %p205 = scmp.le.s32.totalorder 1, %s14
      %p206 = scmp.lt.s32.totalorder %s14, 3
      %p207 = pnand %p205, %p206
      %p208 = pneg %p207
      // Predicated region
      $region9: #{tuckertnt_forward.2} parent=5 // pred_check
        _
      $region10: #{tuckertnt_forward.2} parent=5 // pred_check_branch
        %210 = sbr.rel (%p207) target = $region12
      $region11: #{tuckertnt_forward.2} parent=5 // pred_region
        %s211 = ssub.s32 %s14, 1
        // Predicated region
        $region13: #{tuckertnt_forward.2} parent=11 // pred_check
          %p212 = pneg %p87
        $region14: #{tuckertnt_forward.2} parent=11 // pred_check_branch
          %214 = sbr.rel (%p212) target = $region16
        $region15: #{tuckertnt_forward.2} parent=11 // pred_region
          %216 = vsyncadd [#allocation3], 0
          %s217 = sshll.u32 %s2, 4
          %s218 = int_to_ptr.hbm [resolvable:$true] %s217
          %s219 = sshll.u32 [#allocation2], 4
          %s220 = int_to_ptr.vmem [resolvable:$true] %s219
          %225 = dma.hbm_to_vmem [thread:$0]  %s218, 8192, %s220, [#allocation3], 64, 64, 4
        $region16: #{tuckertnt_forward.2} parent=11 // pred_fallthru
          _
        // Predicated region
        $region17: #{tuckertnt_forward.2} parent=11 // pred_check
          %p226 = pneg %p108
        $region18: #{tuckertnt_forward.2} parent=11 // pred_check_branch
          %228 = sbr.rel (%p226) target = $region20
        $region19: #{tuckertnt_forward.2} parent=11 // pred_region
          _
        $region20: #{tuckertnt_forward.2} parent=11 // pred_fallthru
          _
        // Predicated region
        $region21: #{tuckertnt_forward.2} parent=11 // pred_check
          %p229 = pneg %p129
        $region22: #{tuckertnt_forward.2} parent=11 // pred_check_branch
          %231 = sbr.rel (%p229) target = $region24
        $region23: #{tuckertnt_forward.2} parent=11 // pred_region
          _
        $region24: #{tuckertnt_forward.2} parent=11 // pred_fallthru
          _
        // Predicated region
        $region25: #{tuckertnt_forward.2} parent=11 // pred_check
          %p232 = pneg %p150
        $region26: #{tuckertnt_forward.2} parent=11 // pred_check_branch
          %234 = sbr.rel (%p232) target = $region28
        $region27: #{tuckertnt_forward.2} parent=11 // pred_region
          _
        $region28: #{tuckertnt_forward.2} parent=11 // pred_fallthru
          _
        // Predicated region
        $region29: #{tuckertnt_forward.2} parent=11 // pred_check
          %p235 = pneg %p171
        $region30: #{tuckertnt_forward.2} parent=11 // pred_check_branch
          %237 = sbr.rel (%p235) target = $region32
        $region31: #{tuckertnt_forward.2} parent=11 // pred_region
          _
        $region32: #{tuckertnt_forward.2} parent=11 // pred_fallthru
          _
      $region12: #{tuckertnt_forward.2} parent=5 // pred_fallthru
        _
      %p238 = scmp.lt.s32.totalorder %s14, 2
      // Predicated region
      $region33: #{tuckertnt_forward.2} parent=5 // pred_check
        %p239 = pneg %p238
      $region34: #{tuckertnt_forward.2} parent=5 // pred_check_branch
        %241 = sbr.rel (%p239) target = $region36
      $region35: #{tuckertnt_forward.2} parent=5 // pred_region
        // Predicated region
        $region37: #{tuckertnt_forward.2} parent=35 // pred_check
          %p242 = pneg %p34
        $region38: #{tuckertnt_forward.2} parent=35 // pred_check_branch
          %244 = sbr.rel (%p242) target = $region40
        $region39: #{tuckertnt_forward.2} parent=35 // pred_region
          %p245 = scmp.lt.s32.totalorder %s14, 1
          %s246 = scalar_select %p245, %s14, 1
          %s247 = smul.addr %s246, 8
          %s248 = scalar_lea.vmem %s0, %s247
        $region40: #{tuckertnt_forward.2} parent=35 // pred_fallthru
          _
        // Predicated region
        $region41: #{tuckertnt_forward.2} parent=35 // pred_check
          %p249 = pneg %p60
        $region42: #{tuckertnt_forward.2} parent=35 // pred_check_branch
          %251 = sbr.rel (%p249) target = $region44
        $region43: #{tuckertnt_forward.2} parent=35 // pred_region
          %p252 = scmp.lt.s32.totalorder %s14, 1
          %s253 = scalar_select %p252, %s14, 1
          %s254 = smul.addr %s253, 8
          %s255 = scalar_lea.vmem %s1, %s254
        $region44: #{tuckertnt_forward.2} parent=35 // pred_fallthru
          _
      $region36: #{tuckertnt_forward.2} parent=5 // pred_fallthru
        _
      %p256 = scmp.le.s32.totalorder 1, %s14
      %p257 = scmp.lt.s32.totalorder %s14, 3
      %p258 = pnand %p256, %p257
      %p259 = pneg %p258
      // Predicated region
      $region45: #{tuckertnt_forward.2} parent=5 // pred_check
        _
      $region46: #{tuckertnt_forward.2} parent=5 // pred_check_branch
        %261 = sbr.rel (%p258) target = $region48
      $region47: #{tuckertnt_forward.2} parent=5 // pred_region
        %s262 = ssub.s32 %s14, 1
        // Predicated region
        $region49: #{tuckertnt_forward.2} parent=47 // pred_check
          %p263 = pneg %p87
        $region50: #{tuckertnt_forward.2} parent=47 // pred_check_branch
          %265 = sbr.rel (%p263) target = $region52
        $region51: #{tuckertnt_forward.2} parent=47 // pred_region
          %267 = dma.done [#allocation3], 8192
        $region52: #{tuckertnt_forward.2} parent=47 // pred_fallthru
          _
        %p268 = scmp.lt.s32.totalorder %s19, 1
        %s269 = scalar_select %p268, %s19, 1
        %s270 = smul.addr %s269, 8
        %s271 = scalar_lea.vmem %s0, %s270
        %p272 = pneg %p40
        %p273 = pneg %p37
        %p274 = scmp.lt.s32.totalorder %s19, 1
        %s275 = scalar_select %p274, %s19, 1
        %s276 = smul.addr %s275, 8
        %s277 = scalar_lea.vmem %s1, %s276
        %p278 = pneg %p66
        %p279 = pneg %p63
        %p280 = pneg %p87
        %p281 = pneg %p84
        %p282 = pneg %p108
        %p283 = pneg %p105
        %p284 = pneg %p129
        %p285 = pneg %p126
        %p286 = pneg %p150
        %p287 = pneg %p147
        %p288 = pneg %p171
        %p289 = pneg %p168
        %p290 = pneg %p197
        %p291 = pneg %p194
        %p292 = scmp.lt.s32.totalorder %s19, 1
        %s293 = scalar_select %p292, %s19, 1
        %s294 = smul.addr %s293, 8
        %s295 = scalar_lea.vmem %s7, %s294
        %p296 = scmp.lt.s32.totalorder %s19, 1
        %s297 = scalar_select %p296, %s19, 1
        %s298 = smul.addr %s297, 8
        %s299 = scalar_lea.vmem %s0, %s298
        %p300 = scmp.lt.s32.totalorder %s19, 1
        %s301 = scalar_select %p300, %s19, 1
        %s302 = smul.addr %s301, 8
        %s303 = scalar_lea.vmem %s1, %s302
        %p304 = scmp.lt.s32.totalorder %s19, 1
        %s305 = scalar_select %p304, %s19, 1
        %s306 = smul.addr %s305, 8
        %s307 = scalar_lea.vmem %s7, %s306
        %v309 = vld [vmem:[%s299] sm:$0xff]
        %v310 = vld [vmem:[%s3] sm:$0x1]
        %v312 = vperm.slane %v310, 0
        %v314 = vmul.f32 %v309, %v312
        %v315 = vld [vmem:[%s4] sm:$0x1]
        %v317 = vperm.slane %v315, 0
        %v319 = vadd.f32 %v314, %v317
        %v320 = vld [vmem:[%s303] sm:$0xff]
        %322 = vset.pattern.permute.xlu0 0
        %323 = vperm.xlu0 %322, %v320
        %v324 = vpop.permute.xlu0 %323
        %v326 = vmul.f32 %v324, %v319
        %v327 = vpack.c.bf16 %v326, %v326
        %v328 = vld [vmem:[#allocation2] sm:$0xf]
        %v329 = vld [vmem:[#allocation2 + $0x4] sm:$0xf]
        %v330 = vld [vmem:[#allocation2 + $0x8] sm:$0xf]
        %v331 = vld [vmem:[#allocation2 + $0xc] sm:$0xf]
        %332 = vset.pattern.permute.xlu0 1
        %333 = vperm.xlu0 %332, %v320
        %v334 = vpop.permute.xlu0 %333
        %v336 = vmul.f32 %v334, %v319
        %v337 = vpack.c.bf16 %v336, %v336
        %s338 = scalar_lea.vmem [#allocation2], 16
        %v339 = vld [vmem:[%s338] sm:$0xf]
        %v340 = vld [vmem:[%s338 + $0x4] sm:$0xf]
        %v341 = vld [vmem:[%s338 + $0x8] sm:$0xf]
        %v342 = vld [vmem:[%s338 + $0xc] sm:$0xf]
        %v347 = vunpack.c.l.b16 %v339
        %v348 = vunpack.c.l.b16 %v340
        %v349 = vunpack.c.l.b16 %v341
        %v350 = vunpack.c.l.b16 %v342
        %v351 = vpack.c.b16 %v348, %v347
        %v352 = vpack.c.b16 %v350, %v349
        %vm355 = vcmask 261120
        %v357 = vsel %vm355, %v337, 0
        %359 = vmatpush.bf16.msra.mxu0 0
        %360 = vmatpush.bf16.msra.mxu0 0
        %361 = vmatpush.bf16.msra.mxu0 0
        %362 = vmatpush.bf16.msra.mxu0 0
        %363 = vmatpush.bf16.msra.mxu0 0
        %364 = vmatpush.bf16.msra.mxu0 0
        %365 = vmatpush.bf16.msra.mxu0 %v352
        %366 = vmatpush.bf16.msra.mxu0 %v351
        %367 = vmatmul.bf16.gmra.mxu0 %v357
        %v368 = vpop.f32.mrf.mxu0
        %v369 = vadd.f32 0.0, %v368
        %v370 = vpop.f32.mrf.mxu0
        %371 = vdwg.mxu0
        %v376 = vunpack.c.l.b16 %v328
        %v377 = vunpack.c.l.b16 %v329
        %v378 = vunpack.c.l.b16 %v330
        %v379 = vunpack.c.l.b16 %v331
        %v380 = vpack.c.b16 %v377, %v376
        %v381 = vpack.c.b16 %v379, %v378
        %v385 = vsel %vm355, %v327, 0
        %387 = vmatpush.bf16.msra.mxu0 0
        %388 = vmatpush.bf16.msra.mxu0 0
        %389 = vmatpush.bf16.msra.mxu0 0
        %390 = vmatpush.bf16.msra.mxu0 0
        %391 = vmatpush.bf16.msra.mxu0 0
        %392 = vmatpush.bf16.msra.mxu0 0
        %393 = vmatpush.bf16.msra.mxu0 %v381
        %394 = vmatpush.bf16.msra.mxu0 %v380
        %395 = vmatmul.bf16.gmra.mxu0 %v385
        %v396 = vpop.f32.mrf.mxu0
        %v397 = vadd.f32 %v369, %v396
        %v398 = vpop.f32.mrf.mxu0
        %399 = vdwg.mxu0
        %400 = vset.pattern.permute.xlu0 2
        %401 = vperm.xlu0 %400, %v320
        %v402 = vpop.permute.xlu0 %401
        %v404 = vmul.f32 %v402, %v319
        %v405 = vpack.c.bf16 %v404, %v404
        %s406 = scalar_lea.vmem [#allocation2], 32
        %v407 = vld [vmem:[%s406] sm:$0xf]
        %v408 = vld [vmem:[%s406 + $0x4] sm:$0xf]
        %v409 = vld [vmem:[%s406 + $0x8] sm:$0xf]
        %v410 = vld [vmem:[%s406 + $0xc] sm:$0xf]
        %v415 = vunpack.c.l.b16 %v407
        %v416 = vunpack.c.l.b16 %v408
        %v417 = vunpack.c.l.b16 %v409
        %v418 = vunpack.c.l.b16 %v410
        %v419 = vpack.c.b16 %v416, %v415
        %v420 = vpack.c.b16 %v418, %v417
        %v424 = vsel %vm355, %v405, 0
        %426 = vmatpush.bf16.msra.mxu0 0
        %427 = vmatpush.bf16.msra.mxu0 0
        %428 = vmatpush.bf16.msra.mxu0 0
        %429 = vmatpush.bf16.msra.mxu0 0
        %430 = vmatpush.bf16.msra.mxu0 0
        %431 = vmatpush.bf16.msra.mxu0 0
        %432 = vmatpush.bf16.msra.mxu0 %v420
        %433 = vmatpush.bf16.msra.mxu0 %v419
        %434 = vmatmul.bf16.gmra.mxu0 %v424
        %v435 = vpop.f32.mrf.mxu0
        %v436 = vadd.f32 0.0, %v435
        %v437 = vpop.f32.mrf.mxu0
        %438 = vdwg.mxu0
        %v439 = vadd.f32 %v397, %v436
        %440 = vset.pattern.permute.xlu0 3
        %441 = vperm.xlu0 %440, %v320
        %v442 = vpop.permute.xlu0 %441
        %v444 = vmul.f32 %v442, %v319
        %v445 = vpack.c.bf16 %v444, %v444
        %s446 = scalar_lea.vmem [#allocation2], 48
        %v447 = vld [vmem:[%s446] sm:$0xf]
        %v448 = vld [vmem:[%s446 + $0x4] sm:$0xf]
        %v449 = vld [vmem:[%s446 + $0x8] sm:$0xf]
        %v450 = vld [vmem:[%s446 + $0xc] sm:$0xf]
        %v455 = vunpack.c.l.b16 %v447
        %v456 = vunpack.c.l.b16 %v448
        %v457 = vunpack.c.l.b16 %v449
        %v458 = vunpack.c.l.b16 %v450
        %v459 = vpack.c.b16 %v456, %v455
        %v460 = vpack.c.b16 %v458, %v457
        %v464 = vsel %vm355, %v445, 0
        %466 = vmatpush.bf16.msra.mxu0 0
        %467 = vmatpush.bf16.msra.mxu0 0
        %468 = vmatpush.bf16.msra.mxu0 0
        %469 = vmatpush.bf16.msra.mxu0 0
        %470 = vmatpush.bf16.msra.mxu0 0
        %471 = vmatpush.bf16.msra.mxu0 0
        %472 = vmatpush.bf16.msra.mxu0 %v460
        %473 = vmatpush.bf16.msra.mxu0 %v459
        %474 = vmatmul.bf16.gmra.mxu0 %v464
        %v475 = vpop.f32.mrf.mxu0
        %v476 = vadd.f32 0.0, %v475
        %v477 = vpop.f32.mrf.mxu0
        %478 = vdwg.mxu0
        %v479 = vadd.f32 %v439, %v476
        %480 = vset.pattern.permute.xlu0 4
        %481 = vperm.xlu0 %480, %v320
        %v482 = vpop.permute.xlu0 %481
        %v484 = vmul.f32 %v482, %v319
        %v485 = vpack.c.bf16 %v484, %v484
        %s486 = scalar_lea.vmem [#allocation2], 64
        %v487 = vld [vmem:[%s486] sm:$0xf]
        %v488 = vld [vmem:[%s486 + $0x4] sm:$0xf]
        %v489 = vld [vmem:[%s486 + $0x8] sm:$0xf]
        %v490 = vld [vmem:[%s486 + $0xc] sm:$0xf]
        %v495 = vunpack.c.l.b16 %v487
        %v496 = vunpack.c.l.b16 %v488
        %v497 = vunpack.c.l.b16 %v489
        %v498 = vunpack.c.l.b16 %v490
        %v499 = vpack.c.b16 %v496, %v495
        %v500 = vpack.c.b16 %v498, %v497
        %v504 = vsel %vm355, %v485, 0
        %506 = vmatpush.bf16.msra.mxu0 0
        %507 = vmatpush.bf16.msra.mxu0 0
        %508 = vmatpush.bf16.msra.mxu0 0
        %509 = vmatpush.bf16.msra.mxu0 0
        %510 = vmatpush.bf16.msra.mxu0 0
        %511 = vmatpush.bf16.msra.mxu0 0
        %512 = vmatpush.bf16.msra.mxu0 %v500
        %513 = vmatpush.bf16.msra.mxu0 %v499
        %514 = vmatmul.bf16.gmra.mxu0 %v504
        %v515 = vpop.f32.mrf.mxu0
        %v516 = vadd.f32 0.0, %v515
        %v517 = vpop.f32.mrf.mxu0
        %518 = vdwg.mxu0
        %v519 = vadd.f32 %v479, %v516
        %520 = vset.pattern.permute.xlu0 5
        %521 = vperm.xlu0 %520, %v320
        %v522 = vpop.permute.xlu0 %521
        %v524 = vmul.f32 %v522, %v319
        %v525 = vpack.c.bf16 %v524, %v524
        %s526 = scalar_lea.vmem [#allocation2], 80
        %v527 = vld [vmem:[%s526] sm:$0xf]
        %v528 = vld [vmem:[%s526 + $0x4] sm:$0xf]
        %v529 = vld [vmem:[%s526 + $0x8] sm:$0xf]
        %v530 = vld [vmem:[%s526 + $0xc] sm:$0xf]
        %v535 = vunpack.c.l.b16 %v527
        %v536 = vunpack.c.l.b16 %v528
        %v537 = vunpack.c.l.b16 %v529
        %v538 = vunpack.c.l.b16 %v530
        %v539 = vpack.c.b16 %v536, %v535
        %v540 = vpack.c.b16 %v538, %v537
        %v544 = vsel %vm355, %v525, 0
        %546 = vmatpush.bf16.msra.mxu0 0
        %547 = vmatpush.bf16.msra.mxu0 0
        %548 = vmatpush.bf16.msra.mxu0 0
        %549 = vmatpush.bf16.msra.mxu0 0
        %550 = vmatpush.bf16.msra.mxu0 0
        %551 = vmatpush.bf16.msra.mxu0 0
        %552 = vmatpush.bf16.msra.mxu0 %v540
        %553 = vmatpush.bf16.msra.mxu0 %v539
        %554 = vmatmul.bf16.gmra.mxu0 %v544
        %v555 = vpop.f32.mrf.mxu0
        %v556 = vadd.f32 0.0, %v555
        %v557 = vpop.f32.mrf.mxu0
        %558 = vdwg.mxu0
        %v559 = vadd.f32 %v519, %v556
        %560 = vset.pattern.permute.xlu0 6
        %561 = vperm.xlu0 %560, %v320
        %v562 = vpop.permute.xlu0 %561
        %v564 = vmul.f32 %v562, %v319
        %v565 = vpack.c.bf16 %v564, %v564
        %s566 = scalar_lea.vmem [#allocation2], 96
        %v567 = vld [vmem:[%s566] sm:$0xf]
        %v568 = vld [vmem:[%s566 + $0x4] sm:$0xf]
        %v569 = vld [vmem:[%s566 + $0x8] sm:$0xf]
        %v570 = vld [vmem:[%s566 + $0xc] sm:$0xf]
        %v575 = vunpack.c.l.b16 %v567
        %v576 = vunpack.c.l.b16 %v568
        %v577 = vunpack.c.l.b16 %v569
        %v578 = vunpack.c.l.b16 %v570
        %v579 = vpack.c.b16 %v576, %v575
        %v580 = vpack.c.b16 %v578, %v577
        %v584 = vsel %vm355, %v565, 0
        %586 = vmatpush.bf16.msra.mxu0 0
        %587 = vmatpush.bf16.msra.mxu0 0
        %588 = vmatpush.bf16.msra.mxu0 0
        %589 = vmatpush.bf16.msra.mxu0 0
        %590 = vmatpush.bf16.msra.mxu0 0
        %591 = vmatpush.bf16.msra.mxu0 0
        %592 = vmatpush.bf16.msra.mxu0 %v580
        %593 = vmatpush.bf16.msra.mxu0 %v579
        %594 = vmatmul.bf16.gmra.mxu0 %v584
        %v595 = vpop.f32.mrf.mxu0
        %v596 = vadd.f32 0.0, %v595
        %v597 = vpop.f32.mrf.mxu0
        %598 = vdwg.mxu0
        %v599 = vadd.f32 %v559, %v596
        %600 = vset.pattern.permute.xlu0 7
        %601 = vperm.xlu0 %600, %v320
        %v602 = vpop.permute.xlu0 %601
        %v604 = vmul.f32 %v602, %v319
        %v605 = vpack.c.bf16 %v604, %v604
        %s606 = scalar_lea.vmem [#allocation2], 112
        %v607 = vld [vmem:[%s606] sm:$0xf]
        %v608 = vld [vmem:[%s606 + $0x4] sm:$0xf]
        %v609 = vld [vmem:[%s606 + $0x8] sm:$0xf]
        %v610 = vld [vmem:[%s606 + $0xc] sm:$0xf]
        %v615 = vunpack.c.l.b16 %v607
        %v616 = vunpack.c.l.b16 %v608
        %v617 = vunpack.c.l.b16 %v609
        %v618 = vunpack.c.l.b16 %v610
        %v619 = vpack.c.b16 %v616, %v615
        %v620 = vpack.c.b16 %v618, %v617
        %v624 = vsel %vm355, %v605, 0
        %626 = vmatpush.bf16.msra.mxu0 0
        %627 = vmatpush.bf16.msra.mxu0 0
        %628 = vmatpush.bf16.msra.mxu0 0
        %629 = vmatpush.bf16.msra.mxu0 0
        %630 = vmatpush.bf16.msra.mxu0 0
        %631 = vmatpush.bf16.msra.mxu0 0
        %632 = vmatpush.bf16.msra.mxu0 %v620
        %633 = vmatpush.bf16.msra.mxu0 %v619
        %634 = vmatmul.bf16.gmra.mxu0 %v624
        %v635 = vpop.f32.mrf.mxu0
        %v636 = vadd.f32 0.0, %v635
        %v637 = vpop.f32.mrf.mxu0
        %638 = vdwg.mxu0
        %v639 = vadd.f32 %v599, %v636
        %640 = vset.pattern.permute.xlu0 8
        %641 = vperm.xlu0 %640, %v320
        %v642 = vpop.permute.xlu0 %641
        %v644 = vmul.f32 %v642, %v319
        %v645 = vpack.c.bf16 %v644, %v644
        %s646 = scalar_lea.vmem [#allocation2], 128
        %v647 = vld [vmem:[%s646] sm:$0xf]
        %v648 = vld [vmem:[%s646 + $0x4] sm:$0xf]
        %v649 = vld [vmem:[%s646 + $0x8] sm:$0xf]
        %v650 = vld [vmem:[%s646 + $0xc] sm:$0xf]
        %v655 = vunpack.c.l.b16 %v647
        %v656 = vunpack.c.l.b16 %v648
        %v657 = vunpack.c.l.b16 %v649
        %v658 = vunpack.c.l.b16 %v650
        %v659 = vpack.c.b16 %v656, %v655
        %v660 = vpack.c.b16 %v658, %v657
        %v664 = vsel %vm355, %v645, 0
        %666 = vmatpush.bf16.msra.mxu0 0
        %667 = vmatpush.bf16.msra.mxu0 0
        %668 = vmatpush.bf16.msra.mxu0 0
        %669 = vmatpush.bf16.msra.mxu0 0
        %670 = vmatpush.bf16.msra.mxu0 0
        %671 = vmatpush.bf16.msra.mxu0 0
        %672 = vmatpush.bf16.msra.mxu0 %v660
        %673 = vmatpush.bf16.msra.mxu0 %v659
        %674 = vmatmul.bf16.gmra.mxu0 %v664
        %v675 = vpop.f32.mrf.mxu0
        %v676 = vadd.f32 0.0, %v675
        %v677 = vpop.f32.mrf.mxu0
        %678 = vdwg.mxu0
        %v679 = vadd.f32 %v639, %v676
        %680 = vset.pattern.permute.xlu0 9
        %681 = vperm.xlu0 %680, %v320
        %v682 = vpop.permute.xlu0 %681
        %v684 = vmul.f32 %v682, %v319
        %v685 = vpack.c.bf16 %v684, %v684
        %s686 = scalar_lea.vmem [#allocation2], 144
        %v687 = vld [vmem:[%s686] sm:$0xf]
        %v688 = vld [vmem:[%s686 + $0x4] sm:$0xf]
        %v689 = vld [vmem:[%s686 + $0x8] sm:$0xf]
        %v690 = vld [vmem:[%s686 + $0xc] sm:$0xf]
        %v695 = vunpack.c.l.b16 %v687
        %v696 = vunpack.c.l.b16 %v688
        %v697 = vunpack.c.l.b16 %v689
        %v698 = vunpack.c.l.b16 %v690
        %v699 = vpack.c.b16 %v696, %v695
        %v700 = vpack.c.b16 %v698, %v697
        %v704 = vsel %vm355, %v685, 0
        %706 = vmatpush.bf16.msra.mxu0 0
        %707 = vmatpush.bf16.msra.mxu0 0
        %708 = vmatpush.bf16.msra.mxu0 0
        %709 = vmatpush.bf16.msra.mxu0 0
        %710 = vmatpush.bf16.msra.mxu0 0
        %711 = vmatpush.bf16.msra.mxu0 0
        %712 = vmatpush.bf16.msra.mxu0 %v700
        %713 = vmatpush.bf16.msra.mxu0 %v699
        %714 = vmatmul.bf16.gmra.mxu0 %v704
        %v715 = vpop.f32.mrf.mxu0
        %v716 = vadd.f32 0.0, %v715
        %v717 = vpop.f32.mrf.mxu0
        %718 = vdwg.mxu0
        %v719 = vadd.f32 %v679, %v716
        %720 = vset.pattern.permute.xlu0 10
        %721 = vperm.xlu0 %720, %v320
        %v722 = vpop.permute.xlu0 %721
        %v724 = vmul.f32 %v722, %v319
        %v725 = vpack.c.bf16 %v724, %v724
        %s726 = scalar_lea.vmem [#allocation2], 160
        %v727 = vld [vmem:[%s726] sm:$0xf]
        %v728 = vld [vmem:[%s726 + $0x4] sm:$0xf]
        %v729 = vld [vmem:[%s726 + $0x8] sm:$0xf]
        %v730 = vld [vmem:[%s726 + $0xc] sm:$0xf]
        %v735 = vunpack.c.l.b16 %v727
        %v736 = vunpack.c.l.b16 %v728
        %v737 = vunpack.c.l.b16 %v729
        %v738 = vunpack.c.l.b16 %v730
        %v739 = vpack.c.b16 %v736, %v735
        %v740 = vpack.c.b16 %v738, %v737
        %v744 = vsel %vm355, %v725, 0
        %746 = vmatpush.bf16.msra.mxu0 0
        %747 = vmatpush.bf16.msra.mxu0 0
        %748 = vmatpush.bf16.msra.mxu0 0
        %749 = vmatpush.bf16.msra.mxu0 0
        %750 = vmatpush.bf16.msra.mxu0 0
        %751 = vmatpush.bf16.msra.mxu0 0
        %752 = vmatpush.bf16.msra.mxu0 %v740
        %753 = vmatpush.bf16.msra.mxu0 %v739
        %754 = vmatmul.bf16.gmra.mxu0 %v744
        %v755 = vpop.f32.mrf.mxu0
        %v756 = vadd.f32 0.0, %v755
        %v757 = vpop.f32.mrf.mxu0
        %758 = vdwg.mxu0
        %v759 = vadd.f32 %v719, %v756
        %760 = vset.pattern.permute.xlu0 11
        %761 = vperm.xlu0 %760, %v320
        %v762 = vpop.permute.xlu0 %761
        %v764 = vmul.f32 %v762, %v319
        %v765 = vpack.c.bf16 %v764, %v764
        %s766 = scalar_lea.vmem [#allocation2], 176
        %v767 = vld [vmem:[%s766] sm:$0xf]
        %v768 = vld [vmem:[%s766 + $0x4] sm:$0xf]
        %v769 = vld [vmem:[%s766 + $0x8] sm:$0xf]
        %v770 = vld [vmem:[%s766 + $0xc] sm:$0xf]
        %v775 = vunpack.c.l.b16 %v767
        %v776 = vunpack.c.l.b16 %v768
        %v777 = vunpack.c.l.b16 %v769
        %v778 = vunpack.c.l.b16 %v770
        %v779 = vpack.c.b16 %v776, %v775
        %v780 = vpack.c.b16 %v778, %v777
        %v784 = vsel %vm355, %v765, 0
        %786 = vmatpush.bf16.msra.mxu0 0
        %787 = vmatpush.bf16.msra.mxu0 0
        %788 = vmatpush.bf16.msra.mxu0 0
        %789 = vmatpush.bf16.msra.mxu0 0
        %790 = vmatpush.bf16.msra.mxu0 0
        %791 = vmatpush.bf16.msra.mxu0 0
        %792 = vmatpush.bf16.msra.mxu0 %v780
        %793 = vmatpush.bf16.msra.mxu0 %v779
        %794 = vmatmul.bf16.gmra.mxu0 %v784
        %v795 = vpop.f32.mrf.mxu0
        %v796 = vadd.f32 0.0, %v795
        %v797 = vpop.f32.mrf.mxu0
        %798 = vdwg.mxu0
        %v799 = vadd.f32 %v759, %v796
        %800 = vset.pattern.permute.xlu0 12
        %801 = vperm.xlu0 %800, %v320
        %v802 = vpop.permute.xlu0 %801
        %v804 = vmul.f32 %v802, %v319
        %v805 = vpack.c.bf16 %v804, %v804
        %s806 = scalar_lea.vmem [#allocation2], 192
        %v807 = vld [vmem:[%s806] sm:$0xf]
        %v808 = vld [vmem:[%s806 + $0x4] sm:$0xf]
        %v809 = vld [vmem:[%s806 + $0x8] sm:$0xf]
        %v810 = vld [vmem:[%s806 + $0xc] sm:$0xf]
        %v815 = vunpack.c.l.b16 %v807
        %v816 = vunpack.c.l.b16 %v808
        %v817 = vunpack.c.l.b16 %v809
        %v818 = vunpack.c.l.b16 %v810
        %v819 = vpack.c.b16 %v816, %v815
        %v820 = vpack.c.b16 %v818, %v817
        %v824 = vsel %vm355, %v805, 0
        %826 = vmatpush.bf16.msra.mxu0 0
        %827 = vmatpush.bf16.msra.mxu0 0
        %828 = vmatpush.bf16.msra.mxu0 0
        %829 = vmatpush.bf16.msra.mxu0 0
        %830 = vmatpush.bf16.msra.mxu0 0
        %831 = vmatpush.bf16.msra.mxu0 0
        %832 = vmatpush.bf16.msra.mxu0 %v820
        %833 = vmatpush.bf16.msra.mxu0 %v819
        %834 = vmatmul.bf16.gmra.mxu0 %v824
        %v835 = vpop.f32.mrf.mxu0
        %v836 = vadd.f32 0.0, %v835
        %v837 = vpop.f32.mrf.mxu0
        %838 = vdwg.mxu0
        %v839 = vadd.f32 %v799, %v836
        %840 = vset.pattern.permute.xlu0 13
        %841 = vperm.xlu0 %840, %v320
        %v842 = vpop.permute.xlu0 %841
        %v844 = vmul.f32 %v842, %v319
        %v845 = vpack.c.bf16 %v844, %v844
        %s846 = scalar_lea.vmem [#allocation2], 208
        %v847 = vld [vmem:[%s846] sm:$0xf]
        %v848 = vld [vmem:[%s846 + $0x4] sm:$0xf]
        %v849 = vld [vmem:[%s846 + $0x8] sm:$0xf]
        %v850 = vld [vmem:[%s846 + $0xc] sm:$0xf]
        %v855 = vunpack.c.l.b16 %v847
        %v856 = vunpack.c.l.b16 %v848
        %v857 = vunpack.c.l.b16 %v849
        %v858 = vunpack.c.l.b16 %v850
        %v859 = vpack.c.b16 %v856, %v855
        %v860 = vpack.c.b16 %v858, %v857
        %v864 = vsel %vm355, %v845, 0
        %866 = vmatpush.bf16.msra.mxu0 0
        %867 = vmatpush.bf16.msra.mxu0 0
        %868 = vmatpush.bf16.msra.mxu0 0
        %869 = vmatpush.bf16.msra.mxu0 0
        %870 = vmatpush.bf16.msra.mxu0 0
        %871 = vmatpush.bf16.msra.mxu0 0
        %872 = vmatpush.bf16.msra.mxu0 %v860
        %873 = vmatpush.bf16.msra.mxu0 %v859
        %874 = vmatmul.bf16.gmra.mxu0 %v864
        %v875 = vpop.f32.mrf.mxu0
        %v876 = vadd.f32 0.0, %v875
        %v877 = vpop.f32.mrf.mxu0
        %878 = vdwg.mxu0
        %v879 = vadd.f32 %v839, %v876
        %880 = vset.pattern.permute.xlu0 14
        %881 = vperm.xlu0 %880, %v320
        %v882 = vpop.permute.xlu0 %881
        %v884 = vmul.f32 %v882, %v319
        %v885 = vpack.c.bf16 %v884, %v884
        %s886 = scalar_lea.vmem [#allocation2], 224
        %v887 = vld [vmem:[%s886] sm:$0xf]
        %v888 = vld [vmem:[%s886 + $0x4] sm:$0xf]
        %v889 = vld [vmem:[%s886 + $0x8] sm:$0xf]
        %v890 = vld [vmem:[%s886 + $0xc] sm:$0xf]
        %v895 = vunpack.c.l.b16 %v887
        %v896 = vunpack.c.l.b16 %v888
        %v897 = vunpack.c.l.b16 %v889
        %v898 = vunpack.c.l.b16 %v890
        %v899 = vpack.c.b16 %v896, %v895
        %v900 = vpack.c.b16 %v898, %v897
        %v904 = vsel %vm355, %v885, 0
        %906 = vmatpush.bf16.msra.mxu0 0
        %907 = vmatpush.bf16.msra.mxu0 0
        %908 = vmatpush.bf16.msra.mxu0 0
        %909 = vmatpush.bf16.msra.mxu0 0
        %910 = vmatpush.bf16.msra.mxu0 0
        %911 = vmatpush.bf16.msra.mxu0 0
        %912 = vmatpush.bf16.msra.mxu0 %v900
        %913 = vmatpush.bf16.msra.mxu0 %v899
        %914 = vmatmul.bf16.gmra.mxu0 %v904
        %v915 = vpop.f32.mrf.mxu0
        %v916 = vadd.f32 0.0, %v915
        %v917 = vpop.f32.mrf.mxu0
        %918 = vdwg.mxu0
        %v919 = vadd.f32 %v879, %v916
        %920 = vset.pattern.permute.xlu0 15
        %921 = vperm.xlu0 %920, %v320
        %v922 = vpop.permute.xlu0 %921
        %v924 = vmul.f32 %v922, %v319
        %v925 = vpack.c.bf16 %v924, %v924
        %s926 = scalar_lea.vmem [#allocation2], 240
        %v927 = vld [vmem:[%s926] sm:$0xf]
        %v928 = vld [vmem:[%s926 + $0x4] sm:$0xf]
        %v929 = vld [vmem:[%s926 + $0x8] sm:$0xf]
        %v930 = vld [vmem:[%s926 + $0xc] sm:$0xf]
        %v935 = vunpack.c.l.b16 %v927
        %v936 = vunpack.c.l.b16 %v928
        %v937 = vunpack.c.l.b16 %v929
        %v938 = vunpack.c.l.b16 %v930
        %v939 = vpack.c.b16 %v936, %v935
        %v940 = vpack.c.b16 %v938, %v937
        %v944 = vsel %vm355, %v925, 0
        %946 = vmatpush.bf16.msra.mxu0 0
        %947 = vmatpush.bf16.msra.mxu0 0
        %948 = vmatpush.bf16.msra.mxu0 0
        %949 = vmatpush.bf16.msra.mxu0 0
        %950 = vmatpush.bf16.msra.mxu0 0
        %951 = vmatpush.bf16.msra.mxu0 0
        %952 = vmatpush.bf16.msra.mxu0 %v940
        %953 = vmatpush.bf16.msra.mxu0 %v939
        %954 = vmatmul.bf16.gmra.mxu0 %v944
        %v955 = vpop.f32.mrf.mxu0
        %v956 = vadd.f32 0.0, %v955
        %v957 = vpop.f32.mrf.mxu0
        %958 = vdwg.mxu0
        %v959 = vadd.f32 %v919, %v956
        %960 = vset.pattern.permute.xlu0 16
        %961 = vperm.xlu0 %960, %v320
        %v962 = vpop.permute.xlu0 %961
        %v964 = vmul.f32 %v962, %v319
        %v965 = vpack.c.bf16 %v964, %v964
        %s966 = scalar_lea.vmem [#allocation2], 256
        %v967 = vld [vmem:[%s966] sm:$0xf]
        %v968 = vld [vmem:[%s966 + $0x4] sm:$0xf]
        %v969 = vld [vmem:[%s966 + $0x8] sm:$0xf]
        %v970 = vld [vmem:[%s966 + $0xc] sm:$0xf]
        %v975 = vunpack.c.l.b16 %v967
        %v976 = vunpack.c.l.b16 %v968
        %v977 = vunpack.c.l.b16 %v969
        %v978 = vunpack.c.l.b16 %v970
        %v979 = vpack.c.b16 %v976, %v975
        %v980 = vpack.c.b16 %v978, %v977
        %v984 = vsel %vm355, %v965, 0
        %986 = vmatpush.bf16.msra.mxu0 0
        %987 = vmatpush.bf16.msra.mxu0 0
        %988 = vmatpush.bf16.msra.mxu0 0
        %989 = vmatpush.bf16.msra.mxu0 0
        %990 = vmatpush.bf16.msra.mxu0 0
        %991 = vmatpush.bf16.msra.mxu0 0
        %992 = vmatpush.bf16.msra.mxu0 %v980
        %993 = vmatpush.bf16.msra.mxu0 %v979
        %994 = vmatmul.bf16.gmra.mxu0 %v984
        %v995 = vpop.f32.mrf.mxu0
        %v996 = vadd.f32 0.0, %v995
        %v997 = vpop.f32.mrf.mxu0
        %998 = vdwg.mxu0
        %v999 = vadd.f32 %v959, %v996
        %1000 = vset.pattern.permute.xlu0 17
        %1001 = vperm.xlu0 %1000, %v320
        %v1002 = vpop.permute.xlu0 %1001
        %v1004 = vmul.f32 %v1002, %v319
        %v1005 = vpack.c.bf16 %v1004, %v1004
        %s1006 = scalar_lea.vmem [#allocation2], 272
        %v1007 = vld [vmem:[%s1006] sm:$0xf]
        %v1008 = vld [vmem:[%s1006 + $0x4] sm:$0xf]
        %v1009 = vld [vmem:[%s1006 + $0x8] sm:$0xf]
        %v1010 = vld [vmem:[%s1006 + $0xc] sm:$0xf]
        %v1015 = vunpack.c.l.b16 %v1007
        %v1016 = vunpack.c.l.b16 %v1008
        %v1017 = vunpack.c.l.b16 %v1009
        %v1018 = vunpack.c.l.b16 %v1010
        %v1019 = vpack.c.b16 %v1016, %v1015
        %v1020 = vpack.c.b16 %v1018, %v1017
        %v1024 = vsel %vm355, %v1005, 0
        %1026 = vmatpush.bf16.msra.mxu0 0
        %1027 = vmatpush.bf16.msra.mxu0 0
        %1028 = vmatpush.bf16.msra.mxu0 0
        %1029 = vmatpush.bf16.msra.mxu0 0
        %1030 = vmatpush.bf16.msra.mxu0 0
        %1031 = vmatpush.bf16.msra.mxu0 0
        %1032 = vmatpush.bf16.msra.mxu0 %v1020
        %1033 = vmatpush.bf16.msra.mxu0 %v1019
        %1034 = vmatmul.bf16.gmra.mxu0 %v1024
        %v1035 = vpop.f32.mrf.mxu0
        %v1036 = vadd.f32 0.0, %v1035
        %v1037 = vpop.f32.mrf.mxu0
        %1038 = vdwg.mxu0
        %v1039 = vadd.f32 %v999, %v1036
        %1040 = vset.pattern.permute.xlu0 18
        %1041 = vperm.xlu0 %1040, %v320
        %v1042 = vpop.permute.xlu0 %1041
        %v1044 = vmul.f32 %v1042, %v319
        %v1045 = vpack.c.bf16 %v1044, %v1044
        %s1046 = scalar_lea.vmem [#allocation2], 288
        %v1047 = vld [vmem:[%s1046] sm:$0xf]
        %v1048 = vld [vmem:[%s1046 + $0x4] sm:$0xf]
        %v1049 = vld [vmem:[%s1046 + $0x8] sm:$0xf]
        %v1050 = vld [vmem:[%s1046 + $0xc] sm:$0xf]
        %v1055 = vunpack.c.l.b16 %v1047
        %v1056 = vunpack.c.l.b16 %v1048
        %v1057 = vunpack.c.l.b16 %v1049
        %v1058 = vunpack.c.l.b16 %v1050
        %v1059 = vpack.c.b16 %v1056, %v1055
        %v1060 = vpack.c.b16 %v1058, %v1057
        %v1064 = vsel %vm355, %v1045, 0
        %1066 = vmatpush.bf16.msra.mxu0 0
        %1067 = vmatpush.bf16.msra.mxu0 0
        %1068 = vmatpush.bf16.msra.mxu0 0
        %1069 = vmatpush.bf16.msra.mxu0 0
        %1070 = vmatpush.bf16.msra.mxu0 0
        %1071 = vmatpush.bf16.msra.mxu0 0
        %1072 = vmatpush.bf16.msra.mxu0 %v1060
        %1073 = vmatpush.bf16.msra.mxu0 %v1059
        %1074 = vmatmul.bf16.gmra.mxu0 %v1064
        %v1075 = vpop.f32.mrf.mxu0
        %v1076 = vadd.f32 0.0, %v1075
        %v1077 = vpop.f32.mrf.mxu0
        %1078 = vdwg.mxu0
        %v1079 = vadd.f32 %v1039, %v1076
        %1080 = vset.pattern.permute.xlu0 19
        %1081 = vperm.xlu0 %1080, %v320
        %v1082 = vpop.permute.xlu0 %1081
        %v1084 = vmul.f32 %v1082, %v319
        %v1085 = vpack.c.bf16 %v1084, %v1084
        %s1086 = scalar_lea.vmem [#allocation2], 304
        %v1087 = vld [vmem:[%s1086] sm:$0xf]
        %v1088 = vld [vmem:[%s1086 + $0x4] sm:$0xf]
        %v1089 = vld [vmem:[%s1086 + $0x8] sm:$0xf]
        %v1090 = vld [vmem:[%s1086 + $0xc] sm:$0xf]
        %v1095 = vunpack.c.l.b16 %v1087
        %v1096 = vunpack.c.l.b16 %v1088
        %v1097 = vunpack.c.l.b16 %v1089
        %v1098 = vunpack.c.l.b16 %v1090
        %v1099 = vpack.c.b16 %v1096, %v1095
        %v1100 = vpack.c.b16 %v1098, %v1097
        %v1104 = vsel %vm355, %v1085, 0
        %1106 = vmatpush.bf16.msra.mxu0 0
        %1107 = vmatpush.bf16.msra.mxu0 0
        %1108 = vmatpush.bf16.msra.mxu0 0
        %1109 = vmatpush.bf16.msra.mxu0 0
        %1110 = vmatpush.bf16.msra.mxu0 0
        %1111 = vmatpush.bf16.msra.mxu0 0
        %1112 = vmatpush.bf16.msra.mxu0 %v1100
        %1113 = vmatpush.bf16.msra.mxu0 %v1099
        %1114 = vmatmul.bf16.gmra.mxu0 %v1104
        %v1115 = vpop.f32.mrf.mxu0
        %v1116 = vadd.f32 0.0, %v1115
        %v1117 = vpop.f32.mrf.mxu0
        %1118 = vdwg.mxu0
        %v1119 = vadd.f32 %v1079, %v1116
        %1120 = vset.pattern.permute.xlu0 20
        %1121 = vperm.xlu0 %1120, %v320
        %v1122 = vpop.permute.xlu0 %1121
        %v1124 = vmul.f32 %v1122, %v319
        %v1125 = vpack.c.bf16 %v1124, %v1124
        %s1126 = scalar_lea.vmem [#allocation2], 320
        %v1127 = vld [vmem:[%s1126] sm:$0xf]
        %v1128 = vld [vmem:[%s1126 + $0x4] sm:$0xf]
        %v1129 = vld [vmem:[%s1126 + $0x8] sm:$0xf]
        %v1130 = vld [vmem:[%s1126 + $0xc] sm:$0xf]
        %v1135 = vunpack.c.l.b16 %v1127
        %v1136 = vunpack.c.l.b16 %v1128
        %v1137 = vunpack.c.l.b16 %v1129
        %v1138 = vunpack.c.l.b16 %v1130
        %v1139 = vpack.c.b16 %v1136, %v1135
        %v1140 = vpack.c.b16 %v1138, %v1137
        %v1144 = vsel %vm355, %v1125, 0
        %1146 = vmatpush.bf16.msra.mxu0 0
        %1147 = vmatpush.bf16.msra.mxu0 0
        %1148 = vmatpush.bf16.msra.mxu0 0
        %1149 = vmatpush.bf16.msra.mxu0 0
        %1150 = vmatpush.bf16.msra.mxu0 0
        %1151 = vmatpush.bf16.msra.mxu0 0
        %1152 = vmatpush.bf16.msra.mxu0 %v1140
        %1153 = vmatpush.bf16.msra.mxu0 %v1139
        %1154 = vmatmul.bf16.gmra.mxu0 %v1144
        %v1155 = vpop.f32.mrf.mxu0
        %v1156 = vadd.f32 0.0, %v1155
        %v1157 = vpop.f32.mrf.mxu0
        %1158 = vdwg.mxu0
        %v1159 = vadd.f32 %v1119, %v1156
        %1160 = vset.pattern.permute.xlu0 21
        %1161 = vperm.xlu0 %1160, %v320
        %v1162 = vpop.permute.xlu0 %1161
        %v1164 = vmul.f32 %v1162, %v319
        %v1165 = vpack.c.bf16 %v1164, %v1164
        %s1166 = scalar_lea.vmem [#allocation2], 336
        %v1167 = vld [vmem:[%s1166] sm:$0xf]
        %v1168 = vld [vmem:[%s1166 + $0x4] sm:$0xf]
        %v1169 = vld [vmem:[%s1166 + $0x8] sm:$0xf]
        %v1170 = vld [vmem:[%s1166 + $0xc] sm:$0xf]
        %v1175 = vunpack.c.l.b16 %v1167
        %v1176 = vunpack.c.l.b16 %v1168
        %v1177 = vunpack.c.l.b16 %v1169
        %v1178 = vunpack.c.l.b16 %v1170
        %v1179 = vpack.c.b16 %v1176, %v1175
        %v1180 = vpack.c.b16 %v1178, %v1177
        %v1184 = vsel %vm355, %v1165, 0
        %1186 = vmatpush.bf16.msra.mxu0 0
        %1187 = vmatpush.bf16.msra.mxu0 0
        %1188 = vmatpush.bf16.msra.mxu0 0
        %1189 = vmatpush.bf16.msra.mxu0 0
        %1190 = vmatpush.bf16.msra.mxu0 0
        %1191 = vmatpush.bf16.msra.mxu0 0
        %1192 = vmatpush.bf16.msra.mxu0 %v1180
        %1193 = vmatpush.bf16.msra.mxu0 %v1179
        %1194 = vmatmul.bf16.gmra.mxu0 %v1184
        %v1195 = vpop.f32.mrf.mxu0
        %v1196 = vadd.f32 0.0, %v1195
        %v1197 = vpop.f32.mrf.mxu0
        %1198 = vdwg.mxu0
        %v1199 = vadd.f32 %v1159, %v1196
        %1200 = vset.pattern.permute.xlu0 22
        %1201 = vperm.xlu0 %1200, %v320
        %v1202 = vpop.permute.xlu0 %1201
        %v1204 = vmul.f32 %v1202, %v319
        %v1205 = vpack.c.bf16 %v1204, %v1204
        %s1206 = scalar_lea.vmem [#allocation2], 352
        %v1207 = vld [vmem:[%s1206] sm:$0xf]
        %v1208 = vld [vmem:[%s1206 + $0x4] sm:$0xf]
        %v1209 = vld [vmem:[%s1206 + $0x8] sm:$0xf]
        %v1210 = vld [vmem:[%s1206 + $0xc] sm:$0xf]
        %v1215 = vunpack.c.l.b16 %v1207
        %v1216 = vunpack.c.l.b16 %v1208
        %v1217 = vunpack.c.l.b16 %v1209
        %v1218 = vunpack.c.l.b16 %v1210
        %v1219 = vpack.c.b16 %v1216, %v1215
        %v1220 = vpack.c.b16 %v1218, %v1217
        %v1224 = vsel %vm355, %v1205, 0
        %1226 = vmatpush.bf16.msra.mxu0 0
        %1227 = vmatpush.bf16.msra.mxu0 0
        %1228 = vmatpush.bf16.msra.mxu0 0
        %1229 = vmatpush.bf16.msra.mxu0 0
        %1230 = vmatpush.bf16.msra.mxu0 0
        %1231 = vmatpush.bf16.msra.mxu0 0
        %1232 = vmatpush.bf16.msra.mxu0 %v1220
        %1233 = vmatpush.bf16.msra.mxu0 %v1219
        %1234 = vmatmul.bf16.gmra.mxu0 %v1224
        %v1235 = vpop.f32.mrf.mxu0
        %v1236 = vadd.f32 0.0, %v1235
        %v1237 = vpop.f32.mrf.mxu0
        %1238 = vdwg.mxu0
        %v1239 = vadd.f32 %v1199, %v1236
        %1240 = vset.pattern.permute.xlu0 23
        %1241 = vperm.xlu0 %1240, %v320
        %v1242 = vpop.permute.xlu0 %1241
        %v1244 = vmul.f32 %v1242, %v319
        %v1245 = vpack.c.bf16 %v1244, %v1244
        %s1246 = scalar_lea.vmem [#allocation2], 368
        %v1247 = vld [vmem:[%s1246] sm:$0xf]
        %v1248 = vld [vmem:[%s1246 + $0x4] sm:$0xf]
        %v1249 = vld [vmem:[%s1246 + $0x8] sm:$0xf]
        %v1250 = vld [vmem:[%s1246 + $0xc] sm:$0xf]
        %v1255 = vunpack.c.l.b16 %v1247
        %v1256 = vunpack.c.l.b16 %v1248
        %v1257 = vunpack.c.l.b16 %v1249
        %v1258 = vunpack.c.l.b16 %v1250
        %v1259 = vpack.c.b16 %v1256, %v1255
        %v1260 = vpack.c.b16 %v1258, %v1257
        %v1264 = vsel %vm355, %v1245, 0
        %1266 = vmatpush.bf16.msra.mxu0 0
        %1267 = vmatpush.bf16.msra.mxu0 0
        %1268 = vmatpush.bf16.msra.mxu0 0
        %1269 = vmatpush.bf16.msra.mxu0 0
        %1270 = vmatpush.bf16.msra.mxu0 0
        %1271 = vmatpush.bf16.msra.mxu0 0
        %1272 = vmatpush.bf16.msra.mxu0 %v1260
        %1273 = vmatpush.bf16.msra.mxu0 %v1259
        %1274 = vmatmul.bf16.gmra.mxu0 %v1264
        %v1275 = vpop.f32.mrf.mxu0
        %v1276 = vadd.f32 0.0, %v1275
        %v1277 = vpop.f32.mrf.mxu0
        %1278 = vdwg.mxu0
        %v1279 = vadd.f32 %v1239, %v1276
        %1280 = vset.pattern.permute.xlu0 24
        %1281 = vperm.xlu0 %1280, %v320
        %v1282 = vpop.permute.xlu0 %1281
        %v1284 = vmul.f32 %v1282, %v319
        %v1285 = vpack.c.bf16 %v1284, %v1284
        %s1286 = scalar_lea.vmem [#allocation2], 384
        %v1287 = vld [vmem:[%s1286] sm:$0xf]
        %v1288 = vld [vmem:[%s1286 + $0x4] sm:$0xf]
        %v1289 = vld [vmem:[%s1286 + $0x8] sm:$0xf]
        %v1290 = vld [vmem:[%s1286 + $0xc] sm:$0xf]
        %v1295 = vunpack.c.l.b16 %v1287
        %v1296 = vunpack.c.l.b16 %v1288
        %v1297 = vunpack.c.l.b16 %v1289
        %v1298 = vunpack.c.l.b16 %v1290
        %v1299 = vpack.c.b16 %v1296, %v1295
        %v1300 = vpack.c.b16 %v1298, %v1297
        %v1304 = vsel %vm355, %v1285, 0
        %1306 = vmatpush.bf16.msra.mxu0 0
        %1307 = vmatpush.bf16.msra.mxu0 0
        %1308 = vmatpush.bf16.msra.mxu0 0
        %1309 = vmatpush.bf16.msra.mxu0 0
        %1310 = vmatpush.bf16.msra.mxu0 0
        %1311 = vmatpush.bf16.msra.mxu0 0
        %1312 = vmatpush.bf16.msra.mxu0 %v1300
        %1313 = vmatpush.bf16.msra.mxu0 %v1299
        %1314 = vmatmul.bf16.gmra.mxu0 %v1304
        %v1315 = vpop.f32.mrf.mxu0
        %v1316 = vadd.f32 0.0, %v1315
        %v1317 = vpop.f32.mrf.mxu0
        %1318 = vdwg.mxu0
        %v1319 = vadd.f32 %v1279, %v1316
        %1320 = vset.pattern.permute.xlu0 25
        %1321 = vperm.xlu0 %1320, %v320
        %v1322 = vpop.permute.xlu0 %1321
        %v1324 = vmul.f32 %v1322, %v319
        %v1325 = vpack.c.bf16 %v1324, %v1324
        %s1326 = scalar_lea.vmem [#allocation2], 400
        %v1327 = vld [vmem:[%s1326] sm:$0xf]
        %v1328 = vld [vmem:[%s1326 + $0x4] sm:$0xf]
        %v1329 = vld [vmem:[%s1326 + $0x8] sm:$0xf]
        %v1330 = vld [vmem:[%s1326 + $0xc] sm:$0xf]
        %v1335 = vunpack.c.l.b16 %v1327
        %v1336 = vunpack.c.l.b16 %v1328
        %v1337 = vunpack.c.l.b16 %v1329
        %v1338 = vunpack.c.l.b16 %v1330
        %v1339 = vpack.c.b16 %v1336, %v1335
        %v1340 = vpack.c.b16 %v1338, %v1337
        %v1344 = vsel %vm355, %v1325, 0
        %1346 = vmatpush.bf16.msra.mxu0 0
        %1347 = vmatpush.bf16.msra.mxu0 0
        %1348 = vmatpush.bf16.msra.mxu0 0
        %1349 = vmatpush.bf16.msra.mxu0 0
        %1350 = vmatpush.bf16.msra.mxu0 0
        %1351 = vmatpush.bf16.msra.mxu0 0
        %1352 = vmatpush.bf16.msra.mxu0 %v1340
        %1353 = vmatpush.bf16.msra.mxu0 %v1339
        %1354 = vmatmul.bf16.gmra.mxu0 %v1344
        %v1355 = vpop.f32.mrf.mxu0
        %v1356 = vadd.f32 0.0, %v1355
        %v1357 = vpop.f32.mrf.mxu0
        %1358 = vdwg.mxu0
        %v1359 = vadd.f32 %v1319, %v1356
        %1360 = vset.pattern.permute.xlu0 26
        %1361 = vperm.xlu0 %1360, %v320
        %v1362 = vpop.permute.xlu0 %1361
        %v1364 = vmul.f32 %v1362, %v319
        %v1365 = vpack.c.bf16 %v1364, %v1364
        %s1366 = scalar_lea.vmem [#allocation2], 416
        %v1367 = vld [vmem:[%s1366] sm:$0xf]
        %v1368 = vld [vmem:[%s1366 + $0x4] sm:$0xf]
        %v1369 = vld [vmem:[%s1366 + $0x8] sm:$0xf]
        %v1370 = vld [vmem:[%s1366 + $0xc] sm:$0xf]
        %v1375 = vunpack.c.l.b16 %v1367
        %v1376 = vunpack.c.l.b16 %v1368
        %v1377 = vunpack.c.l.b16 %v1369
        %v1378 = vunpack.c.l.b16 %v1370
        %v1379 = vpack.c.b16 %v1376, %v1375
        %v1380 = vpack.c.b16 %v1378, %v1377
        %v1384 = vsel %vm355, %v1365, 0
        %1386 = vmatpush.bf16.msra.mxu0 0
        %1387 = vmatpush.bf16.msra.mxu0 0
        %1388 = vmatpush.bf16.msra.mxu0 0
        %1389 = vmatpush.bf16.msra.mxu0 0
        %1390 = vmatpush.bf16.msra.mxu0 0
        %1391 = vmatpush.bf16.msra.mxu0 0
        %1392 = vmatpush.bf16.msra.mxu0 %v1380
        %1393 = vmatpush.bf16.msra.mxu0 %v1379
        %1394 = vmatmul.bf16.gmra.mxu0 %v1384
        %v1395 = vpop.f32.mrf.mxu0
        %v1396 = vadd.f32 0.0, %v1395
        %v1397 = vpop.f32.mrf.mxu0
        %1398 = vdwg.mxu0
        %v1399 = vadd.f32 %v1359, %v1396
        %1400 = vset.pattern.permute.xlu0 27
        %1401 = vperm.xlu0 %1400, %v320
        %v1402 = vpop.permute.xlu0 %1401
        %v1404 = vmul.f32 %v1402, %v319
        %v1405 = vpack.c.bf16 %v1404, %v1404
        %s1406 = scalar_lea.vmem [#allocation2], 432
        %v1407 = vld [vmem:[%s1406] sm:$0xf]
        %v1408 = vld [vmem:[%s1406 + $0x4] sm:$0xf]
        %v1409 = vld [vmem:[%s1406 + $0x8] sm:$0xf]
        %v1410 = vld [vmem:[%s1406 + $0xc] sm:$0xf]
        %v1415 = vunpack.c.l.b16 %v1407
        %v1416 = vunpack.c.l.b16 %v1408
        %v1417 = vunpack.c.l.b16 %v1409
        %v1418 = vunpack.c.l.b16 %v1410
        %v1419 = vpack.c.b16 %v1416, %v1415
        %v1420 = vpack.c.b16 %v1418, %v1417
        %v1424 = vsel %vm355, %v1405, 0
        %1426 = vmatpush.bf16.msra.mxu0 0
        %1427 = vmatpush.bf16.msra.mxu0 0
        %1428 = vmatpush.bf16.msra.mxu0 0
        %1429 = vmatpush.bf16.msra.mxu0 0
        %1430 = vmatpush.bf16.msra.mxu0 0
        %1431 = vmatpush.bf16.msra.mxu0 0
        %1432 = vmatpush.bf16.msra.mxu0 %v1420
        %1433 = vmatpush.bf16.msra.mxu0 %v1419
        %1434 = vmatmul.bf16.gmra.mxu0 %v1424
        %v1435 = vpop.f32.mrf.mxu0
        %v1436 = vadd.f32 0.0, %v1435
        %v1437 = vpop.f32.mrf.mxu0
        %1438 = vdwg.mxu0
        %v1439 = vadd.f32 %v1399, %v1436
        %1440 = vset.pattern.permute.xlu0 28
        %1441 = vperm.xlu0 %1440, %v320
        %v1442 = vpop.permute.xlu0 %1441
        %v1444 = vmul.f32 %v1442, %v319
        %v1445 = vpack.c.bf16 %v1444, %v1444
        %s1446 = scalar_lea.vmem [#allocation2], 448
        %v1447 = vld [vmem:[%s1446] sm:$0xf]
        %v1448 = vld [vmem:[%s1446 + $0x4] sm:$0xf]
        %v1449 = vld [vmem:[%s1446 + $0x8] sm:$0xf]
        %v1450 = vld [vmem:[%s1446 + $0xc] sm:$0xf]
        %v1455 = vunpack.c.l.b16 %v1447
        %v1456 = vunpack.c.l.b16 %v1448
        %v1457 = vunpack.c.l.b16 %v1449
        %v1458 = vunpack.c.l.b16 %v1450
        %v1459 = vpack.c.b16 %v1456, %v1455
        %v1460 = vpack.c.b16 %v1458, %v1457
        %v1464 = vsel %vm355, %v1445, 0
        %1466 = vmatpush.bf16.msra.mxu0 0
        %1467 = vmatpush.bf16.msra.mxu0 0
        %1468 = vmatpush.bf16.msra.mxu0 0
        %1469 = vmatpush.bf16.msra.mxu0 0
        %1470 = vmatpush.bf16.msra.mxu0 0
        %1471 = vmatpush.bf16.msra.mxu0 0
        %1472 = vmatpush.bf16.msra.mxu0 %v1460
        %1473 = vmatpush.bf16.msra.mxu0 %v1459
        %1474 = vmatmul.bf16.gmra.mxu0 %v1464
        %v1475 = vpop.f32.mrf.mxu0
        %v1476 = vadd.f32 0.0, %v1475
        %v1477 = vpop.f32.mrf.mxu0
        %1478 = vdwg.mxu0
        %v1479 = vadd.f32 %v1439, %v1476
        %1480 = vset.pattern.permute.xlu0 29
        %1481 = vperm.xlu0 %1480, %v320
        %v1482 = vpop.permute.xlu0 %1481
        %v1484 = vmul.f32 %v1482, %v319
        %v1485 = vpack.c.bf16 %v1484, %v1484
        %s1486 = scalar_lea.vmem [#allocation2], 464
        %v1487 = vld [vmem:[%s1486] sm:$0xf]
        %v1488 = vld [vmem:[%s1486 + $0x4] sm:$0xf]
        %v1489 = vld [vmem:[%s1486 + $0x8] sm:$0xf]
        %v1490 = vld [vmem:[%s1486 + $0xc] sm:$0xf]
        %v1495 = vunpack.c.l.b16 %v1487
        %v1496 = vunpack.c.l.b16 %v1488
        %v1497 = vunpack.c.l.b16 %v1489
        %v1498 = vunpack.c.l.b16 %v1490
        %v1499 = vpack.c.b16 %v1496, %v1495
        %v1500 = vpack.c.b16 %v1498, %v1497
        %v1504 = vsel %vm355, %v1485, 0
        %1506 = vmatpush.bf16.msra.mxu0 0
        %1507 = vmatpush.bf16.msra.mxu0 0
        %1508 = vmatpush.bf16.msra.mxu0 0
        %1509 = vmatpush.bf16.msra.mxu0 0
        %1510 = vmatpush.bf16.msra.mxu0 0
        %1511 = vmatpush.bf16.msra.mxu0 0
        %1512 = vmatpush.bf16.msra.mxu0 %v1500
        %1513 = vmatpush.bf16.msra.mxu0 %v1499
        %1514 = vmatmul.bf16.gmra.mxu0 %v1504
        %v1515 = vpop.f32.mrf.mxu0
        %v1516 = vadd.f32 0.0, %v1515
        %v1517 = vpop.f32.mrf.mxu0
        %1518 = vdwg.mxu0
        %v1519 = vadd.f32 %v1479, %v1516
        %1520 = vset.pattern.permute.xlu0 30
        %1521 = vperm.xlu0 %1520, %v320
        %v1522 = vpop.permute.xlu0 %1521
        %v1524 = vmul.f32 %v1522, %v319
        %v1525 = vpack.c.bf16 %v1524, %v1524
        %s1526 = scalar_lea.vmem [#allocation2], 480
        %v1527 = vld [vmem:[%s1526] sm:$0xf]
        %v1528 = vld [vmem:[%s1526 + $0x4] sm:$0xf]
        %v1529 = vld [vmem:[%s1526 + $0x8] sm:$0xf]
        %v1530 = vld [vmem:[%s1526 + $0xc] sm:$0xf]
        %v1535 = vunpack.c.l.b16 %v1527
        %v1536 = vunpack.c.l.b16 %v1528
        %v1537 = vunpack.c.l.b16 %v1529
        %v1538 = vunpack.c.l.b16 %v1530
        %v1539 = vpack.c.b16 %v1536, %v1535
        %v1540 = vpack.c.b16 %v1538, %v1537
        %v1544 = vsel %vm355, %v1525, 0
        %1546 = vmatpush.bf16.msra.mxu0 0
        %1547 = vmatpush.bf16.msra.mxu0 0
        %1548 = vmatpush.bf16.msra.mxu0 0
        %1549 = vmatpush.bf16.msra.mxu0 0
        %1550 = vmatpush.bf16.msra.mxu0 0
        %1551 = vmatpush.bf16.msra.mxu0 0
        %1552 = vmatpush.bf16.msra.mxu0 %v1540
        %1553 = vmatpush.bf16.msra.mxu0 %v1539
        %1554 = vmatmul.bf16.gmra.mxu0 %v1544
        %v1555 = vpop.f32.mrf.mxu0
        %v1556 = vadd.f32 0.0, %v1555
        %v1557 = vpop.f32.mrf.mxu0
        %1558 = vdwg.mxu0
        %v1559 = vadd.f32 %v1519, %v1556
        %1560 = vset.pattern.permute.xlu0 31
        %1561 = vperm.xlu0 %1560, %v320
        %v1562 = vpop.permute.xlu0 %1561
        %v1564 = vmul.f32 %v1562, %v319
        %v1565 = vpack.c.bf16 %v1564, %v1564
        %s1566 = scalar_lea.vmem [#allocation2], 496
        %v1567 = vld [vmem:[%s1566] sm:$0xf]
        %v1568 = vld [vmem:[%s1566 + $0x4] sm:$0xf]
        %v1569 = vld [vmem:[%s1566 + $0x8] sm:$0xf]
        %v1570 = vld [vmem:[%s1566 + $0xc] sm:$0xf]
        %v1575 = vunpack.c.l.b16 %v1567
        %v1576 = vunpack.c.l.b16 %v1568
        %v1577 = vunpack.c.l.b16 %v1569
        %v1578 = vunpack.c.l.b16 %v1570
        %v1579 = vpack.c.b16 %v1576, %v1575
        %v1580 = vpack.c.b16 %v1578, %v1577
        %v1584 = vsel %vm355, %v1565, 0
        %1586 = vmatpush.bf16.msra.mxu0 0
        %1587 = vmatpush.bf16.msra.mxu0 0
        %1588 = vmatpush.bf16.msra.mxu0 0
        %1589 = vmatpush.bf16.msra.mxu0 0
        %1590 = vmatpush.bf16.msra.mxu0 0
        %1591 = vmatpush.bf16.msra.mxu0 0
        %1592 = vmatpush.bf16.msra.mxu0 %v1580
        %1593 = vmatpush.bf16.msra.mxu0 %v1579
        %1594 = vmatmul.bf16.gmra.mxu0 %v1584
        %v1595 = vpop.f32.mrf.mxu0
        %v1596 = vadd.f32 0.0, %v1595
        %v1597 = vpop.f32.mrf.mxu0
        %1598 = vdwg.mxu0
        %v1599 = vadd.f32 %v1559, %v1596
        %v1600 = vld [vmem:[%s5] sm:$0x1]
        %v1602 = vperm.slane %v1600, 0
        %v1604 = vmul.f32 %v1599, %v1602
        %v1605 = vld [vmem:[%s6] sm:$0x1]
        %v1607 = vperm.slane %v1605, 0
        %v1609 = vadd.f32 %v1604, %v1607
        %1610 = vst.msk [vmem:[%s307] sm:$0xff] %vm355, %v1609
        %p1611 = scmp.lt.s32.totalorder %s19, 1
        %s1612 = scalar_select %p1611, %s19, 1
        %s1613 = smul.addr %s1612, 8
        %s1614 = scalar_lea.vmem %s7, %s1613
        // Predicated region
        $region53: #{tuckertnt_forward.2} parent=47 // pred_check
          %p1615 = pneg %p194
        $region54: #{tuckertnt_forward.2} parent=47 // pred_check_branch
          %1617 = sbr.rel (%p1615) target = $region56
        $region55: #{tuckertnt_forward.2} parent=47 // pred_region
          _
        $region56: #{tuckertnt_forward.2} parent=47 // pred_fallthru
          _
      $region48: #{tuckertnt_forward.2} parent=5 // pred_fallthru
        _
      %p1618 = scmp.le.s32.totalorder 2, %s14
      // Predicated region
      $region57: #{tuckertnt_forward.2} parent=5 // pred_check
        %p1619 = pneg %p1618
      $region58: #{tuckertnt_forward.2} parent=5 // pred_check_branch
        %1621 = sbr.rel (%p1619) target = $region60
      $region59: #{tuckertnt_forward.2} parent=5 // pred_region
        %s1622 = ssub.s32 %s14, 2
        // Predicated region
        $region61: #{tuckertnt_forward.2} parent=59 // pred_check
          %p1623 = pneg %p200
        $region62: #{tuckertnt_forward.2} parent=59 // pred_check_branch
          %1625 = sbr.rel (%p1623) target = $region64
        $region63: #{tuckertnt_forward.2} parent=59 // pred_region
          %p1626 = scmp.lt.s32.totalorder %s20, 1
          %s1627 = scalar_select %p1626, %s20, 1
          %s1628 = smul.addr %s1627, 8
          %s1629 = scalar_lea.vmem %s7, %s1628
        $region64: #{tuckertnt_forward.2} parent=59 // pred_fallthru
          _
      $region60: #{tuckertnt_forward.2} parent=5 // pred_fallthru
        _
    $region6: #{tuckertnt_forward.2} parent=1 // loop_footer
      %s18 = sadd.s32 1, %s14
    $region7: #{tuckertnt_forward.2} parent=1 // loop_footer_branch
      %13 = sbr.rel target = $region3
    $region8: #{tuckertnt_forward.2} parent=1 // loop_exit
      _
    %1630 = vsyncpa [#allocation3], 1
    %s1631 = scalar_lea.sflag [#allocation3], 1
    %1632 = vsyncpa %s1631, 1

</llo_original>
